<compile_context>
chip_gen: v7x
topology: tpu7x:2x2x1
jax: 0.10.0
libtpu: 0.0.40
codegen_flags: <defaults>
</compile_context>

<pallas_src>
import functools

import jax
import jax.numpy as jnp
import numpy as np
from jax.experimental import pallas as pl
from jax.experimental.pallas import tpu as pltpu


def _hybrid_loss_kernel(x_ref, mask_ref, fw_ref, wre_hbm, wim_hbm,
                        out_ref, wre_vmem, wim_vmem, acc_ref):
    s = pl.program_id(1)
    Bb, _, Dp, T = x_ref.shape
    Kp = wre_vmem.shape[1]

    @pl.when(s == 0)
    def _init():
        # One-time (per group) DMA of the grid-invariant DFT matrices into VMEM
        # scratch: single resident copy, no per-step re-fetch, no double buffers.
        pltpu.sync_copy(wre_hbm, wre_vmem)
        pltpu.sync_copy(wim_hbm, wim_vmem)
        acc_ref[...] = jnp.zeros_like(acc_ref)

    x = x_ref[...]            # (Bb, 2, Dp, T) f32 feature-major; [:,0]=pred, [:,1]=target
    m = mask_ref[...]         # (Bb, 1, T)
    fw = fw_ref[...]          # (Bb, 1, Kp)  per-bin rfft weights (0 on padded bins/rows)

    # ---- time domain: VPU FMAs + reductions on the otherwise-idle XLU ----
    diff = x[:, 0] - x[:, 1]                               # (Bb, Dp, T)
    t_sse = jnp.sum(diff * diff * m)                       # scalar partial

    # ---- frequency domain: one lane-dense shared LHS, two explicit-precision dots ----
    lhs = x.reshape(2 * Bb * Dp, T)                        # free relabel (Dp % 8 == 0)
    re = jnp.dot(lhs, wre_vmem[...], preferred_element_type=jnp.float32,
                 precision=jax.lax.Precision.HIGHEST)      # (2*Bb*Dp, Kp)
    im = jnp.dot(lhs, wim_vmem[...], preferred_element_type=jnp.float32,
                 precision=jax.lax.Precision.HIGHEST)      # (2*Bb*Dp, Kp)
    mag = jnp.sqrt(re * re + im * im).reshape(Bb, 2, Dp, Kp)
    fd = mag[:, 0] - mag[:, 1]                             # |P| - |T|
    f_sse = jnp.sum(fd * fd * fw)                          # scalar partial

    # accumulate both partials into one lane-padded scratch row: lane0=time, lane1=freq
    lane = jax.lax.broadcasted_iota(jnp.int32, acc_ref.shape, 1)
    acc_ref[...] += jnp.where(lane == 0, t_sse, 0.0) + jnp.where(lane == 1, f_sse, 0.0)

    @pl.when(s == pl.num_programs(1) - 1)
    def _finalize():
        out_ref[...] = acc_ref[...].reshape(out_ref.shape)


@functools.lru_cache(maxsize=None)
def _dft_matrices(T: int, K: int, Kp: int):
    # rfft-style DFT matrices, built once per (T, K) on the host: integer (n*k) mod T
    # in int64 (no overflow) -> float64 angles -> f32 cast. Columns >= K are zeroed.
    n = np.arange(T, dtype=np.int64)[:, None]
    k = np.arange(Kp, dtype=np.int64)[None, :]
    ang = (2.0 * np.pi / T) * ((n * k) % T)
    keep = k < K
    wre = np.where(keep, np.cos(ang), 0.0).astype(np.float32)    # (T, Kp)
    wim = np.where(keep, -np.sin(ang), 0.0).astype(np.float32)   # (T, Kp)
    return jnp.asarray(wre), jnp.asarray(wim)


def hybrid_loss(pred, target, mask, alpha):
    """pred/target: (B, T, D); mask: (B, T) of 0/1. Returns the scalar hybrid loss."""
    B, T, D = pred.shape
    f32 = jnp.float32

    # rfft bins padded to a full 128-lane multiple (unmasked MXU N tiles / stores);
    # feature dim padded to a sublane multiple so in-kernel reshapes are free.
    K = T // 2 + 1
    Kp = ((K + 127) // 128) * 128
    Dp = ((D + 7) // 8) * 8
    wre, wim = _dft_matrices(T, K, Kp)

    # Batch blocking: G=2 parallel groups (both v7x TCs; harmless on v5e/v6e), Bb
    # elements per step so the MXU LHS has ~256 rows. Zero-padding contributes 0.
    G = 2
    per_group = max(1, -(-B // G))
    Bb = max(1, min(8, -(-256 // (2 * Dp))))
    Bb = min(Bb, per_group)
    S = -(-per_group // Bb)
    B_pad = G * S * Bb

    # One fused wrapper pass: upcast + stack(pred, target) + feature-major transpose
    # + zero padding of batch / feature dims.
    xs = jnp.stack([pred.astype(f32), target.astype(f32)], axis=1)   # (B, 2, T, D)
    xs = jnp.swapaxes(xs, 2, 3)                                      # (B, 2, D, T)
    xs = jnp.pad(xs, ((0, B_pad - B), (0, 0), (0, Dp - D), (0, 0)))  # (B_pad, 2, Dp, T)

    m = jnp.pad(mask.astype(f32), ((0, B_pad - B), (0, 0)))          # (B_pad, T)
    mask_r = m.reshape(B_pad, 1, T)

    # per-batch rfft-bin weights: mask[k] (+ mask[T-k] for paired bins); 0 on pads.
    k = np.arange(Kp)
    kc = np.minimum(k, T - 1)
    mirror = (T - kc) % T
    self_paired = (kc == 0) | ((T % 2 == 0) & (kc == T // 2))
    pair_w = jnp.asarray(np.where(self_paired, 0.0, 1.0), dtype=f32)
    valid_k = jnp.asarray(k < K)
    fw = m[:, kc] + pair_w[None, :] * m[:, mirror]
    fw = jnp.where(valid_k[None, :], fw, 0.0).reshape(B_pad, 1, Kp)

    data_idx = lambda g, s: (g * S + s, 0, 0, 0)
    vec_idx = lambda g, s: (g * S + s, 0, 0)
    out_idx = lambda g, s: (g, 0, 0)

    # Explicit VMEM budget: double-buffered per-step blocks + single-copy DFT scratch
    # + matmul intermediates, with headroom; capped well under 128 MiB physical.
    isz = 4
    vmem_bytes = (2 * (Bb * 2 * Dp * T) * isz            # xs blocks (double-buffered)
                  + 2 * (Bb * T + Bb * Kp) * isz         # mask + fw blocks
                  + 2 * (T * Kp) * isz                   # wre + wim scratch (single)
                  + 6 * (2 * Bb * Dp * Kp) * isz         # re / im / mag intermediates
                  + 4 * 128 * isz)                       # out block + accumulator
    vmem_limit = int(min(vmem_bytes * 2 + (8 << 20), 100 << 20))

    partials = pl.pallas_call(
        _hybrid_loss_kernel,
        out_shape=jax.ShapeDtypeStruct((G, 1, 128), f32),
        grid_spec=pltpu.PrefetchScalarGridSpec(
            num_scalar_prefetch=0,
            grid=(G, S),
            in_specs=[
                pl.BlockSpec((Bb, 2, Dp, T), data_idx),    # stacked pred/target
                pl.BlockSpec((Bb, 1, T), vec_idx),         # time mask
                pl.BlockSpec((Bb, 1, Kp), vec_idx),        # rfft-bin mask weights
                pl.BlockSpec(memory_space=pl.ANY),         # DFT cos  (DMA'd once/group)
                pl.BlockSpec(memory_space=pl.ANY),         # DFT -sin (DMA'd once/group)
            ],
            out_specs=pl.BlockSpec((1, 1, 128), out_idx),
            scratch_shapes=[
                pltpu.VMEM((T, Kp), f32),     # resident DFT cos
                pltpu.VMEM((T, Kp), f32),     # resident DFT -sin
                pltpu.VMEM((1, 128), f32),    # packed [time_sse, freq_sse, 0, ...]
            ]),
        compiler_params=pltpu.CompilerParams(
            dimension_semantics=("parallel", "arbitrary"),
            vmem_limit_bytes=vmem_limit),
    )(xs, mask_r, fw, wre, wim)

    t_sse = partials[:, 0, 0].sum()
    f_sse = partials[:, 0, 1].sum()
    valid = mask.astype(f32).sum() * D       # == mask.unsqueeze(-1).expand_as(pred).sum()
    a = f32(alpha)
    # NOTE: like the reference module, an all-zero mask yields inf/nan (no guard).
    return (a * t_sse + (1.0 - a) * f_sse) / valid


def hybrid_loss_ref(pred, target, mask, alpha):
    m = mask[..., None] * jnp.ones_like(pred)
    valid = m.sum()
    time_loss = (((pred - target) ** 2) * m).sum() / valid
    pf = jnp.abs(jnp.fft.fft(pred, axis=1))
    tf = jnp.abs(jnp.fft.fft(target, axis=1))
    freq_loss = (((pf - tf) ** 2) * m).sum() / valid
    return alpha * time_loss + (1.0 - alpha) * freq_loss


if __name__ == "__main__":
    key = jax.random.PRNGKey(0)
    k1, k2, k3 = jax.random.split(key, 3)
    B, T, D = 2, 8, 32
    alpha = 0.7

    pred = jax.random.normal(k1, (B, T, D), dtype=jnp.float32)
    target = jax.random.normal(k2, (B, T, D), dtype=jnp.float32)
    mask = (jax.random.uniform(k3, (B, T)) > 0.3).astype(jnp.float32)
    mask = mask.at[0, 0].set(1.0)  # guarantee at least one valid element

    loss = hybrid_loss(pred, target, mask, alpha)
    jax.block_until_ready(loss)

    ref = hybrid_loss_ref(pred, target, mask, alpha)
    assert jnp.allclose(loss, ref, rtol=5e-4, atol=1e-5), (loss, ref)
    print("KERNEL_OK")
</pallas_src>

<mosaic_0001>
module attributes {stable_mosaic.version = 11 : i64} {
  func.func @_hybrid_loss_kernel(%arg0: i32, %arg1: i32, %arg2: memref<1x2x32x8xf32, #tpu.memory_space<vmem>>, %arg3: memref<1x1x8xf32, #tpu.memory_space<vmem>>, %arg4: memref<1x1x128xf32, #tpu.memory_space<vmem>>, %arg5: memref<8x128xf32, #tpu.memory_space<any>>, %arg6: memref<8x128xf32, #tpu.memory_space<any>>, %arg7: memref<1x1x128xf32, #tpu.memory_space<vmem>>, %arg8: memref<8x128xf32, #tpu.memory_space<vmem>>, %arg9: memref<8x128xf32, #tpu.memory_space<vmem>>, %arg10: memref<1x128xf32, #tpu.memory_space<vmem>>) attributes {dimension_semantics = [#tpu.dimension_semantics<parallel>, #tpu.dimension_semantics<arbitrary>], iteration_bounds = array<i64: 2, 1>, scalar_prefetch = 0 : i64, scratch_operands = 3 : i64, tpu.core_type = #tpu.core_type<tc>, window_params = [{transform_indices = @transform_0, window_bounds = array<i64: 1, 2, 32, 8>}, {transform_indices = @transform_1, window_bounds = array<i64: 1, 1, 8>}, {transform_indices = @transform_2, window_bounds = array<i64: 1, 1, 128>}, {}, {}, {transform_indices = @transform_5, window_bounds = array<i64: 1, 1, 128>}]} {
    %c0_i32 = arith.constant 0 : i32
    %0 = arith.cmpi eq, %arg1, %c0_i32 : i32
    %1 = arith.extui %0 : i1 to i32
    %c0_i32_0 = arith.constant 0 : i32
    %2 = arith.cmpi ne, %1, %c0_i32_0 : i32
    scf.if %2 {
      "tpu.region"() ({
        %60 = tpu.sem_alloc : memref<!tpu.dma_semaphore, #tpu.memory_space<semaphore_mem>>
        tpu.enqueue_dma source(%arg5 : memref<8x128xf32, #tpu.memory_space<any>>) target(%arg8 : memref<8x128xf32, #tpu.memory_space<vmem>>) target_semaphore(%60 : memref<!tpu.dma_semaphore, #tpu.memory_space<semaphore_mem>>)
        tpu.wait_dma2 semaphore(%60 : memref<!tpu.dma_semaphore, #tpu.memory_space<semaphore_mem>>) src(%arg5 : memref<8x128xf32, #tpu.memory_space<any>>) dst(%arg8 : memref<8x128xf32, #tpu.memory_space<vmem>>)
        tpu.yield
      }) : () -> ()
      "tpu.region"() ({
        %60 = tpu.sem_alloc : memref<!tpu.dma_semaphore, #tpu.memory_space<semaphore_mem>>
        tpu.enqueue_dma source(%arg6 : memref<8x128xf32, #tpu.memory_space<any>>) target(%arg9 : memref<8x128xf32, #tpu.memory_space<vmem>>) target_semaphore(%60 : memref<!tpu.dma_semaphore, #tpu.memory_space<semaphore_mem>>)
        tpu.wait_dma2 semaphore(%60 : memref<!tpu.dma_semaphore, #tpu.memory_space<semaphore_mem>>) src(%arg6 : memref<8x128xf32, #tpu.memory_space<any>>) dst(%arg9 : memref<8x128xf32, #tpu.memory_space<vmem>>)
        tpu.yield
      }) : () -> ()
      %cst_26 = arith.constant 0.000000e+00 : f32
      %58 = vector.broadcast %cst_26 : f32 to vector<1x128xf32>
      %c0_27 = arith.constant 0 : index
      %c0_28 = arith.constant 0 : index
      %59 = vector.load %arg10[%c0_27, %c0_28] : memref<1x128xf32, #tpu.memory_space<vmem>>, vector<1x128xf32>
      tpu.vector_store %arg10[%c0_27, %c0_28], %58 {strides = array<i32>} : memref<1x128xf32, #tpu.memory_space<vmem>>, vector<1x128xf32>,
    } else {
    }
    %c0 = arith.constant 0 : index
    %c0_1 = arith.constant 0 : index
    %c0_2 = arith.constant 0 : index
    %c0_3 = arith.constant 0 : index
    %3 = vector.load %arg2[%c0, %c0_1, %c0_2, %c0_3] : memref<1x2x32x8xf32, #tpu.memory_space<vmem>>, vector<1x2x32x8xf32>
    %c0_4 = arith.constant 0 : index
    %c0_5 = arith.constant 0 : index
    %c0_6 = arith.constant 0 : index
    %4 = vector.load %arg3[%c0_4, %c0_5, %c0_6] : memref<1x1x8xf32, #tpu.memory_space<vmem>>, vector<1x1x8xf32>
    %c0_7 = arith.constant 0 : index
    %c0_8 = arith.constant 0 : index
    %c0_9 = arith.constant 0 : index
    %5 = vector.load %arg4[%c0_7, %c0_8, %c0_9] : memref<1x1x128xf32, #tpu.memory_space<vmem>>, vector<1x1x128xf32>
    %6 = vector.extract_strided_slice %3 {offsets = [0, 0, 0, 0], sizes = [1, 1, 32, 8], strides = [1, 1, 1, 1]} : vector<1x2x32x8xf32> to vector<1x1x32x8xf32>
    %7 = vector.shape_cast %6 : vector<1x1x32x8xf32> to vector<1x32x8xf32>
    %8 = vector.extract_strided_slice %3 {offsets = [0, 1, 0, 0], sizes = [1, 1, 32, 8], strides = [1, 1, 1, 1]} : vector<1x2x32x8xf32> to vector<1x1x32x8xf32>
    %9 = vector.shape_cast %8 : vector<1x1x32x8xf32> to vector<1x32x8xf32>
    %10 = arith.subf %7, %9 : vector<1x32x8xf32>
    %11 = arith.mulf %10, %10 : vector<1x32x8xf32>
    %12 = vector.broadcast %4 : vector<1x1x8xf32> to vector<1x32x8xf32>
    %13 = arith.mulf %11, %12 : vector<1x32x8xf32>
    %14 = vector.shape_cast %13 : vector<1x32x8xf32> to vector<1x1x32x8xf32>
    %cst = arith.constant dense<0.000000e+00> : vector<1xf32>
    %15 = vector.multi_reduction <add>, %14, %cst [1, 2, 3] : vector<1x1x32x8xf32> to vector<1xf32>
    %16 = vector.shape_cast %15 : vector<1xf32> to vector<1x1x1x1xf32>
    %17 = vector.extract %16[0, 0, 0, 0] : f32 from vector<1x1x1x1xf32>
    %18 = vector.shape_cast %3 : vector<1x2x32x8xf32> to vector<64x8xf32>
    %c0_10 = arith.constant 0 : index
    %c0_11 = arith.constant 0 : index
    %19 = vector.load %arg8[%c0_10, %c0_11] : memref<8x128xf32, #tpu.memory_space<vmem>>, vector<8x128xf32>
    %cst_12 = arith.constant dense<0.000000e+00> : vector<64x128xf32>
    %20 = tpu.matmul %18, %19, %cst_12 {dimension_numbers = #tpu.dot_dimension_numbers<[1], [0], [0], [1], [0, 0, 1, 1], [], []>, precision = #tpu.contract_precision<fp32>} : vector<64x8xf32>, vector<8x128xf32>, vector<64x128xf32> -> vector<64x128xf32>
    %c0_13 = arith.constant 0 : index
    %c0_14 = arith.constant 0 : index
    %21 = vector.load %arg9[%c0_13, %c0_14] : memref<8x128xf32, #tpu.memory_space<vmem>>, vector<8x128xf32>
    %cst_15 = arith.constant dense<0.000000e+00> : vector<64x128xf32>
    %22 = tpu.matmul %18, %21, %cst_15 {dimension_numbers = #tpu.dot_dimension_numbers<[1], [0], [0], [1], [0, 0, 1, 1], [], []>, precision = #tpu.contract_precision<fp32>} : vector<64x8xf32>, vector<8x128xf32>, vector<64x128xf32> -> vector<64x128xf32>
    %23 = arith.mulf %20, %20 : vector<64x128xf32>
    %24 = arith.mulf %22, %22 : vector<64x128xf32>
    %25 = arith.addf %23, %24 : vector<64x128xf32>
    %26 = math.sqrt %25 : vector<64x128xf32>
    %27 = vector.shape_cast %26 : vector<64x128xf32> to vector<1x2x32x128xf32>
    %28 = vector.extract_strided_slice %27 {offsets = [0, 0, 0, 0], sizes = [1, 1, 32, 128], strides = [1, 1, 1, 1]} : vector<1x2x32x128xf32> to vector<1x1x32x128xf32>
    %29 = vector.shape_cast %28 : vector<1x1x32x128xf32> to vector<1x32x128xf32>
    %30 = vector.extract_strided_slice %27 {offsets = [0, 1, 0, 0], sizes = [1, 1, 32, 128], strides = [1, 1, 1, 1]} : vector<1x2x32x128xf32> to vector<1x1x32x128xf32>
    %31 = vector.shape_cast %30 : vector<1x1x32x128xf32> to vector<1x32x128xf32>
    %32 = arith.subf %29, %31 : vector<1x32x128xf32>
    %33 = arith.mulf %32, %32 : vector<1x32x128xf32>
    %34 = vector.broadcast %5 : vector<1x1x128xf32> to vector<1x32x128xf32>
    %35 = arith.mulf %33, %34 : vector<1x32x128xf32>
    %36 = vector.shape_cast %35 : vector<1x32x128xf32> to vector<1x1x32x128xf32>
    %cst_16 = arith.constant dense<0.000000e+00> : vector<1xf32>
    %37 = vector.multi_reduction <add>, %36, %cst_16 [1, 2, 3] : vector<1x1x32x128xf32> to vector<1xf32>
    %38 = vector.shape_cast %37 : vector<1xf32> to vector<1x1x1x1xf32>
    %39 = vector.extract %38[0, 0, 0, 0] : f32 from vector<1x1x1x1xf32>
    %40 = tpu.iota {dimensions = array<i32: 1>} : vector<1x128xi32>
    %c0_17 = arith.constant 0 : index
    %c0_18 = arith.constant 0 : index
    %41 = vector.load %arg10[%c0_17, %c0_18] : memref<1x128xf32, #tpu.memory_space<vmem>>, vector<1x128xf32>
    %c0_i32_19 = arith.constant 0 : i32
    %42 = vector.broadcast %c0_i32_19 : i32 to vector<1x128xi32>
    %43 = arith.cmpi eq, %40, %42 : vector<1x128xi32>
    %cst_20 = arith.constant 0.000000e+00 : f32
    %44 = vector.broadcast %17 : f32 to vector<1x128xf32>
    %45 = vector.broadcast %cst_20 : f32 to vector<1x128xf32>
    %46 = arith.select %43, %44, %45 : vector<1x128xi1>, vector<1x128xf32>
    %c1_i32 = arith.constant 1 : i32
    %47 = vector.broadcast %c1_i32 : i32 to vector<1x128xi32>
    %48 = arith.cmpi eq, %40, %47 : vector<1x128xi32>
    %cst_21 = arith.constant 0.000000e+00 : f32
    %49 = vector.broadcast %39 : f32 to vector<1x128xf32>
    %50 = vector.broadcast %cst_21 : f32 to vector<1x128xf32>
    %51 = arith.select %48, %49, %50 : vector<1x128xi1>, vector<1x128xf32>
    %52 = arith.addf %46, %51 : vector<1x128xf32>
    %53 = arith.addf %41, %52 : vector<1x128xf32>
    %c0_22 = arith.constant 0 : index
    %c0_23 = arith.constant 0 : index
    %54 = vector.load %arg10[%c0_22, %c0_23] : memref<1x128xf32, #tpu.memory_space<vmem>>, vector<1x128xf32>
    tpu.vector_store %arg10[%c0_22, %c0_23], %53 {strides = array<i32>} : memref<1x128xf32, #tpu.memory_space<vmem>>, vector<1x128xf32>,
    %c0_i32_24 = arith.constant 0 : i32
    %55 = arith.cmpi eq, %arg1, %c0_i32_24 : i32
    %56 = arith.extui %55 : i1 to i32
    %c0_i32_25 = arith.constant 0 : i32
    %57 = arith.cmpi ne, %56, %c0_i32_25 : i32
    scf.if %57 {
      %c0_26 = arith.constant 0 : index
      %c0_27 = arith.constant 0 : index
      %58 = vector.load %arg10[%c0_26, %c0_27] : memref<1x128xf32, #tpu.memory_space<vmem>>, vector<1x128xf32>
      %59 = vector.shape_cast %58 : vector<1x128xf32> to vector<1x1x128xf32>
      %c0_28 = arith.constant 0 : index
      %c0_29 = arith.constant 0 : index
      %c0_30 = arith.constant 0 : index
      %60 = vector.load %arg7[%c0_28, %c0_29, %c0_30] : memref<1x1x128xf32, #tpu.memory_space<vmem>>, vector<1x1x128xf32>
      tpu.vector_store %arg7[%c0_28, %c0_29, %c0_30], %59 {strides = array<i32>} : memref<1x1x128xf32, #tpu.memory_space<vmem>>, vector<1x1x128xf32>,
    } else {
    }
    return
  }
  func.func @transform_0(%arg0: i32, %arg1: i32) -> (i32, i32, i32, i32) {
    %c1_i32 = arith.constant 1 : i32
    %0 = arith.muli %arg0, %c1_i32 : i32
    %1 = arith.addi %0, %arg1 : i32
    %c0_i32 = arith.constant 0 : i32
    %c0_i32_0 = arith.constant 0 : i32
    %c0_i32_1 = arith.constant 0 : i32
    %c0_i32_2 = arith.constant 0 : i32
    return %1, %c0_i32, %c0_i32_0, %c0_i32_1 : i32, i32, i32, i32
  }
  func.func @transform_1(%arg0: i32, %arg1: i32) -> (i32, i32, i32) {
    %c1_i32 = arith.constant 1 : i32
    %0 = arith.muli %arg0, %c1_i32 : i32
    %1 = arith.addi %0, %arg1 : i32
    %c0_i32 = arith.constant 0 : i32
    %c0_i32_0 = arith.constant 0 : i32
    %c0_i32_1 = arith.constant 0 : i32
    return %1, %c0_i32, %c0_i32_0 : i32, i32, i32
  }
  func.func @transform_2(%arg0: i32, %arg1: i32) -> (i32, i32, i32) {
    %c1_i32 = arith.constant 1 : i32
    %0 = arith.muli %arg0, %c1_i32 : i32
    %1 = arith.addi %0, %arg1 : i32
    %c0_i32 = arith.constant 0 : i32
    %c0_i32_0 = arith.constant 0 : i32
    %c0_i32_1 = arith.constant 0 : i32
    return %1, %c0_i32, %c0_i32_0 : i32, i32, i32
  }
  func.func @transform_5(%arg0: i32, %arg1: i32) -> (i32, i32, i32) {
    %c0_i32 = arith.constant 0 : i32
    %c0_i32_0 = arith.constant 0 : i32
    %c0_i32_1 = arith.constant 0 : i32
    return %arg0, %c0_i32, %c0_i32_0 : i32, i32, i32
  }
}

</mosaic_0001>

<llo_original>
// kernel: tpu_custom_call.1
$region0: #{tpu_custom_call.1}
  #allocation0 [shape = 'u32[]', space=smem, size = 0x4, offset = 0x4, fixed_abs, tag = 'smem constant byte address 0x4 - core index']
  #allocation1 [shape = 'u32[144,128]{1,0:T(1,128)}', space=vmem, size = 0x12000, scoped, tag = 'internal scratch']
  #allocation2 [shape = 'f32[8,128]{1,0:T(8,128)}', space=vmem, size = 0x1000, scoped, tag = 'scratch operand']
  #allocation3 [shape = 'f32[8,128]{1,0:T(8,128)}', space=vmem, size = 0x1000, scoped, tag = 'scratch operand']
  #allocation4 [shape = 'f32[1,128]{1,0:T(1,128)}', space=vmem, size = 0x200, scoped, tag = 'scratch operand']
  #allocation8 [shape = 's32[]', space=sflag, size = 0x4, offset = 0, fixed_abs, tag = 'sflag constant byte address 0x0 - dummy sync flag']
  #allocation10 [shape = 's32[]', space=sflag, size = 0x4, offset = 0, fixed_abs, tag = 'sflag constant byte address 0x0 - dummy sync flag']
  %s0 = inlined_call_operand.vmem [shape: f32[2,2,32,8], index: 0, kind: input, shape index: {}]
  %s1 = inlined_call_operand.vmem [shape: f32[2,1,8], index: 1, kind: input, shape index: {}]
  %s2 = inlined_call_operand.vmem [shape: f32[2,1,128], index: 2, kind: input, shape index: {}]
  %s3 = inlined_call_operand.vmem [shape: f32[8,128], index: 3, kind: input, shape index: {}]
  %s4 = inlined_call_operand.vmem [shape: f32[8,128], index: 4, kind: input, shape index: {}]
  %s5 = inlined_call_operand.hbm [shape: f32[2,1,128], index: 5, kind: output, shape index: {}]
  %s6 = sld [smem:[#allocation0]]
  $region123: #{tpu_custom_call.1} parent=0
    _
  %s8 = ssub.s32 1, %s6
  %s9 = scalar_select 0, %s8, %s6
  $region1: #{tpu_custom_call.1} parent=0
    #allocation5 [shape = 'u8[1024]{0}', space=vmem, size = 0x400, scoped, tag = 'output window, operand 0']
    #allocation6 [shape = 's32[2]{0}', space=sflag, size = 0x8, scoped, tag = 'scoped memory for tpu_custom_call.1']
    %10 = vsyncpa [#allocation6], 0
    %s11 = scalar_lea.sflag [#allocation6], 1
    %12 = vsyncpa %s11, 0
    loop: start=0, step=1, limit=4
    $region2: #{tpu_custom_call.1} parent=1 // loop_pre_header
      _
    $region3: #{tpu_custom_call.1} parent=1 // loop_header
      %s14 = sphi 0, %s18
      %p15 = scmp.ge.s32.totalorder %s14, 4
      %s21 = sphi 0, %s33
      %s22 = sphi 0, %s29
      %s23 = sphi 0, %s21
      %s24 = sphi 0, %s22
      %s25 = sphi 0, %s23
      %s26 = sphi 0, %s24
      %s38 = sphi 0, %s40
      %s41 = sphi 0, %s38
      %s42 = sphi 0, %s41
      %s58 = sphi 0, %s42
      %s66 = sphi 0, %s68
      %s69 = sphi 0, %s66
      %s70 = sphi 0, %s69
      %s86 = sphi 0, %s70
      %s94 = sphi 0, %s96
      %s97 = sphi 0, %s94
      %s98 = sphi 0, %s97
      %s114 = sphi 0, %s98
      %s120 = sphi 0, %s122
      %s123 = sphi 0, %s120
      %s124 = sphi 0, %s123
      %s140 = sphi 0, %s124
    $region4: #{tpu_custom_call.1} parent=1 // loop_header_branch
      %17 = sbr.rel (%p15) target = $region8
    $region5: #{tpu_custom_call.1} parent=1 // loop_body
      %s19 = ssub.s32 %s14, 1
      %s20 = ssub.s32 %s14, 2
      %s27 = sadd.s32 1, %s22
      %p28 = scmp.ge.s32.totalorder %s27, 1
      %s29 = scalar_select %p28, 0, %s27
      %s30 = sadd.s32 1, %s21
      %s31 = scalar_select %p28, %s30, %s21
      %p32 = scmp.ge.s32.totalorder %s31, 2
      %s33 = scalar_select %p32, 0, %s31
      %s34 = sadd.s32 %s21, %s22
      %s35 = sadd.s32 %s33, %s29
      %s36 = ssub.s32 %s34, %s35
      %p37 = scmp.eq.s32.totalorder %s36, 0
      %s39 = sadd.s32 %s38, 1
      %s40 = scalar_select %p37, %s38, %s39
      %p43 = pneg %p37
      %p44 = scmp.eq.s32.totalorder %s14, 1
      %p45 = por %p43, %p44
      %p46 = scmp.ne.s32.totalorder %s38, %s41
      %p47 = scmp.eq.s32.totalorder %s14, 0
      %p48 = por %p46, %p47
      %p49 = scmp.ne.s32.totalorder %s38, %s41
      %p50 = scmp.eq.s32.totalorder %s19, 1
      %p51 = por %p49, %p50
      %p52 = scmp.ne.s32.totalorder %s41, %s42
      %p53 = scmp.eq.s32.totalorder %s19, 0
      %p54 = por %p52, %p53
      %p55 = scmp.ne.s32.totalorder %s41, %s42
      %p56 = scmp.eq.s32.totalorder %s20, 1
      %p57 = por %p55, %p56
      %p59 = scmp.ne.s32.totalorder %s42, %s58
      %p60 = scmp.eq.s32.totalorder %s20, 0
      %p61 = por %p59, %p60
      %s62 = sadd.s32 %s21, %s22
      %s63 = sadd.s32 %s33, %s29
      %s64 = ssub.s32 %s62, %s63
      %p65 = scmp.eq.s32.totalorder %s64, 0
      %s67 = sadd.s32 %s66, 1
      %s68 = scalar_select %p65, %s66, %s67
      %p71 = pneg %p65
      %p72 = scmp.eq.s32.totalorder %s14, 1
      %p73 = por %p71, %p72
      %p74 = scmp.ne.s32.totalorder %s66, %s69
      %p75 = scmp.eq.s32.totalorder %s14, 0
      %p76 = por %p74, %p75
      %p77 = scmp.ne.s32.totalorder %s66, %s69
      %p78 = scmp.eq.s32.totalorder %s19, 1
      %p79 = por %p77, %p78
      %p80 = scmp.ne.s32.totalorder %s69, %s70
      %p81 = scmp.eq.s32.totalorder %s19, 0
      %p82 = por %p80, %p81
      %p83 = scmp.ne.s32.totalorder %s69, %s70
      %p84 = scmp.eq.s32.totalorder %s20, 1
      %p85 = por %p83, %p84
      %p87 = scmp.ne.s32.totalorder %s70, %s86
      %p88 = scmp.eq.s32.totalorder %s20, 0
      %p89 = por %p87, %p88
      %s90 = sadd.s32 %s21, %s22
      %s91 = sadd.s32 %s33, %s29
      %s92 = ssub.s32 %s90, %s91
      %p93 = scmp.eq.s32.totalorder %s92, 0
      %s95 = sadd.s32 %s94, 1
      %s96 = scalar_select %p93, %s94, %s95
      %p99 = pneg %p93
      %p100 = scmp.eq.s32.totalorder %s14, 1
      %p101 = por %p99, %p100
      %p102 = scmp.ne.s32.totalorder %s94, %s97
      %p103 = scmp.eq.s32.totalorder %s14, 0
      %p104 = por %p102, %p103
      %p105 = scmp.ne.s32.totalorder %s94, %s97
      %p106 = scmp.eq.s32.totalorder %s19, 1
      %p107 = por %p105, %p106
      %p108 = scmp.ne.s32.totalorder %s97, %s98
      %p109 = scmp.eq.s32.totalorder %s19, 0
      %p110 = por %p108, %p109
      %p111 = scmp.ne.s32.totalorder %s97, %s98
      %p112 = scmp.eq.s32.totalorder %s20, 1
      %p113 = por %p111, %p112
      %p115 = scmp.ne.s32.totalorder %s98, %s114
      %p116 = scmp.eq.s32.totalorder %s20, 0
      %p117 = por %p115, %p116
      %s118 = ssub.s32 %s21, %s33
      %p119 = scmp.eq.s32.totalorder %s118, 0
      %s121 = sadd.s32 %s120, 1
      %s122 = scalar_select %p119, %s120, %s121
      %p125 = pneg %p119
      %p126 = scmp.eq.s32.totalorder %s14, 1
      %p127 = por %p125, %p126
      %p128 = scmp.ne.s32.totalorder %s120, %s123
      %p129 = scmp.eq.s32.totalorder %s14, 0
      %p130 = por %p128, %p129
      %p131 = scmp.ne.s32.totalorder %s120, %s123
      %p132 = scmp.eq.s32.totalorder %s19, 1
      %p133 = por %p131, %p132
      %p134 = scmp.ne.s32.totalorder %s123, %s124
      %p135 = scmp.eq.s32.totalorder %s19, 0
      %p136 = por %p134, %p135
      %p137 = scmp.ne.s32.totalorder %s123, %s124
      %p138 = scmp.eq.s32.totalorder %s20, 1
      %p139 = por %p137, %p138
      %p141 = scmp.ne.s32.totalorder %s124, %s140
      %p142 = scmp.eq.s32.totalorder %s20, 0
      %p143 = por %p141, %p142
      %p144 = scmp.le.s32.totalorder 1, %s14
      %p145 = scmp.lt.s32.totalorder %s14, 3
      %p146 = pnand %p144, %p145
      %p147 = pneg %p146
      // Predicated region
      $region9: #{tpu_custom_call.1} parent=5 // pred_check
        _
      $region10: #{tpu_custom_call.1} parent=5 // pred_check_branch
        %149 = sbr.rel (%p146) target = $region12
      $region11: #{tpu_custom_call.1} parent=5 // pred_region
        %s150 = ssub.s32 %s14, 1
      $region12: #{tpu_custom_call.1} parent=5 // pred_fallthru
        _
      %p151 = scmp.lt.s32.totalorder %s14, 2
      // Predicated region
      $region13: #{tpu_custom_call.1} parent=5 // pred_check
        %p152 = pneg %p151
      $region14: #{tpu_custom_call.1} parent=5 // pred_check_branch
        %154 = sbr.rel (%p152) target = $region16
      $region15: #{tpu_custom_call.1} parent=5 // pred_region
        // Predicated region
        $region17: #{tpu_custom_call.1} parent=15 // pred_check
          %p155 = pneg %p48
        $region18: #{tpu_custom_call.1} parent=15 // pred_check_branch
          %157 = sbr.rel (%p155) target = $region20
        $region19: #{tpu_custom_call.1} parent=15 // pred_region
          %s158 = sadd.s32 %s21, %s22
          %p159 = scmp.lt.s32.totalorder %s158, 1
          %s160 = scalar_select %p159, %s158, 1
          %s161 = smul.addr %s160, 8
          %s162 = smul.addr %s161, 8
          %s163 = scalar_lea.vmem %s0, %s162
          %s164 = sadd.s32 %s21, %s22
        $region20: #{tpu_custom_call.1} parent=15 // pred_fallthru
          _
        // Predicated region
        $region21: #{tpu_custom_call.1} parent=15 // pred_check
          %p165 = pneg %p76
        $region22: #{tpu_custom_call.1} parent=15 // pred_check_branch
          %167 = sbr.rel (%p165) target = $region24
        $region23: #{tpu_custom_call.1} parent=15 // pred_region
          %s168 = sadd.s32 %s21, %s22
          %p169 = scmp.lt.s32.totalorder %s168, 1
          %s170 = scalar_select %p169, %s168, 1
          %s171 = scalar_lea.vmem %s1, %s170
          %s172 = sadd.s32 %s21, %s22
        $region24: #{tpu_custom_call.1} parent=15 // pred_fallthru
          _
        // Predicated region
        $region25: #{tpu_custom_call.1} parent=15 // pred_check
          %p173 = pneg %p104
        $region26: #{tpu_custom_call.1} parent=15 // pred_check_branch
          %175 = sbr.rel (%p173) target = $region28
        $region27: #{tpu_custom_call.1} parent=15 // pred_region
          %s176 = sadd.s32 %s21, %s22
          %p177 = scmp.lt.s32.totalorder %s176, 1
          %s178 = scalar_select %p177, %s176, 1
          %s179 = scalar_lea.vmem %s2, %s178
          %s180 = sadd.s32 %s21, %s22
        $region28: #{tpu_custom_call.1} parent=15 // pred_fallthru
          _
      $region16: #{tpu_custom_call.1} parent=5 // pred_fallthru
        _
      %p181 = scmp.le.s32.totalorder 1, %s14
      %p182 = scmp.lt.s32.totalorder %s14, 3
      %p183 = pnand %p181, %p182
      %p184 = pneg %p183
      // Predicated region
      $region29: #{tpu_custom_call.1} parent=5 // pred_check
        _
      $region30: #{tpu_custom_call.1} parent=5 // pred_check_branch
        %186 = sbr.rel (%p183) target = $region32
      $region31: #{tpu_custom_call.1} parent=5 // pred_region
        %s187 = ssub.s32 %s14, 1
        %s188 = sadd.s32 %s23, %s24
        %p189 = scmp.lt.s32.totalorder %s188, 1
        %s190 = scalar_select %p189, %s188, 1
        %s191 = smul.addr %s190, 8
        %s192 = smul.addr %s191, 8
        %s193 = scalar_lea.vmem %s0, %s192
        %p194 = pneg %p54
        %p195 = pneg %p51
        %s196 = sadd.s32 %s23, %s24
        %p197 = scmp.lt.s32.totalorder %s196, 1
        %s198 = scalar_select %p197, %s196, 1
        %s199 = scalar_lea.vmem %s1, %s198
        %p200 = pneg %p82
        %p201 = pneg %p79
        %s202 = sadd.s32 %s23, %s24
        %p203 = scmp.lt.s32.totalorder %s202, 1
        %s204 = scalar_select %p203, %s202, 1
        %s205 = scalar_lea.vmem %s2, %s204
        %p206 = pneg %p110
        %p207 = pneg %p107
        %p208 = pneg %p136
        %p209 = pneg %p133
        %s210 = sand.u32 %s123, 1
        %s211 = scalar_lea.sflag [#allocation6], %s210
        %s212 = sand.u32 %s123, 1
        %s213 = scalar_lea.vmem [#allocation5], %s212
        %s214 = sadd.s32 %s23, %s24
        %p215 = scmp.lt.s32.totalorder %s214, 1
        %s216 = scalar_select %p215, %s214, 1
        %s217 = smul.addr %s216, 8
        %s218 = smul.addr %s217, 8
        %s219 = scalar_lea.vmem %s0, %s218
        %s220 = sadd.s32 %s23, %s24
        %s221 = sadd.s32 %s23, %s24
        %p222 = scmp.lt.s32.totalorder %s221, 1
        %s223 = scalar_select %p222, %s221, 1
        %s224 = scalar_lea.vmem %s1, %s223
        %s225 = sadd.s32 %s23, %s24
        %s226 = sadd.s32 %s23, %s24
        %p227 = scmp.lt.s32.totalorder %s226, 1
        %s228 = scalar_select %p227, %s226, 1
        %s229 = scalar_lea.vmem %s2, %s228
        %s230 = sadd.s32 %s23, %s24
        %p231 = scmp.eq.s32.totalorder %s24, 0
        // Predicated region
        $region33: #{tpu_custom_call.1} parent=31 // pred_check
          %p232 = pneg %p231
        $region34: #{tpu_custom_call.1} parent=31 // pred_check_branch
          %234 = sbr.rel (%p232) target = $region36
        $region35: #{tpu_custom_call.1} parent=31 // pred_region
          $region37: #{tpu_custom_call.1} parent=35
            #allocation7 [shape = 's32[1]{0}', space=sflag, size = 0x4, scoped, tag = 'scoped memory for tpu_custom_call.1']
            %p236 = scmp.lt.u32.totalorder 8, 8
            %p237 = pneg %p236
            // Predicated region
            $region38: #{tpu_custom_call.1} parent=37 // pred_check
              _
            $region39: #{tpu_custom_call.1} parent=37 // pred_check_branch
              %239 = sbr.rel (%p236) target = $region41
            $region40: #{tpu_custom_call.1} parent=37 // pred_region
              %s254 = sand.u32 8, 7
              %p255 = scmp.eq.s32.totalorder %s254, 0
              // Predicated region
              $region53: #{tpu_custom_call.1} parent=40 // pred_check
                %p256 = pneg %p255
              $region54: #{tpu_custom_call.1} parent=40 // pred_check_branch
                %258 = sbr.rel (%p256) target = $region56
              $region55: #{tpu_custom_call.1} parent=40 // pred_region
                loop: start=0, step=1, limit=1
                $region57: #{tpu_custom_call.1} parent=55 // loop_pre_header
                  _
                $region58: #{tpu_custom_call.1} parent=55 // loop_header
                  %s260 = sphi 0, %s264
                  %p261 = scmp.ge.s32.totalorder %s260, 1
                  %s265 = sphi %s3, %s3
                  %s266 = sphi [#allocation2], [#allocation2]
                $region59: #{tpu_custom_call.1} parent=55 // loop_header_branch
                  %263 = sbr.rel (%p261) target = $region63
                $region60: #{tpu_custom_call.1} parent=55 // loop_body
                  %v267 = vld [vmem:[%s265] sm:$0xff]
                  %268 = vst [vmem:[%s266] sm:$0xff] %v267
                $region61: #{tpu_custom_call.1} parent=55 // loop_footer
                  %s264 = sadd.s32 1, %s260
                $region62: #{tpu_custom_call.1} parent=55 // loop_footer_branch
                  %259 = sbr.rel target = $region58
                $region63: #{tpu_custom_call.1} parent=55 // loop_exit
                  _
              $region56: #{tpu_custom_call.1} parent=40 // pred_fallthru
                _
              %p269 = pneg %p255
              // Predicated region
              $region64: #{tpu_custom_call.1} parent=40 // pred_check
                _
              $region65: #{tpu_custom_call.1} parent=40 // pred_check_branch
                %271 = sbr.rel (%p255) target = $region67
              $region66: #{tpu_custom_call.1} parent=40 // pred_region
                %s272 = sand.u32 8, 7
              $region67: #{tpu_custom_call.1} parent=40 // pred_fallthru
                _
            $region41: #{tpu_custom_call.1} parent=37 // pred_fallthru
              _
            // Predicated region
            $region42: #{tpu_custom_call.1} parent=37 // pred_check
              %p240 = pneg %p236
            $region43: #{tpu_custom_call.1} parent=37 // pred_check_branch
              %242 = sbr.rel (%p240) target = $region45
            $region44: #{tpu_custom_call.1} parent=37 // pred_region
              %s243 = sshllo.u32 0, 8
              loop: start=0, step=1, limit=1
              $region46: #{tpu_custom_call.1} parent=44 // loop_pre_header
                _
              $region47: #{tpu_custom_call.1} parent=44 // loop_header
                %s245 = sphi 0, %s249
                %p246 = scmp.ge.s32.totalorder %s245, 1
                %s250 = sphi %s3, %s3
                %s251 = sphi [#allocation2], [#allocation2]
              $region48: #{tpu_custom_call.1} parent=44 // loop_header_branch
                %248 = sbr.rel (%p246) target = $region52
              $region49: #{tpu_custom_call.1} parent=44 // loop_body
                %v252 = vld [vmem:[%s250] sm:%s243]
                %253 = vst [vmem:[%s251] sm:%s243] %v252
              $region50: #{tpu_custom_call.1} parent=44 // loop_footer
                %s249 = sadd.s32 1, %s245
              $region51: #{tpu_custom_call.1} parent=44 // loop_footer_branch
                %244 = sbr.rel target = $region47
              $region52: #{tpu_custom_call.1} parent=44 // loop_exit
                _
            $region45: #{tpu_custom_call.1} parent=37 // pred_fallthru
              _
            // Predicated region
            $region68: #{tpu_custom_call.1} parent=37 // pred_check
              _
            $region69: #{tpu_custom_call.1} parent=37 // pred_check_branch
              %275 = sbr.rel (0) target = $region71
            $region70: #{tpu_custom_call.1} parent=37 // pred_region
              %276 = vsyncadd [#allocation7], 128
            $region71: #{tpu_custom_call.1} parent=37 // pred_fallthru
              _
            %s277 = smul.u32 8, 1
            %s278 = sshll.u32 %s277, 4
            %279 = dma.done [#allocation7], %s278
          $region72: #{tpu_custom_call.1} parent=35
            #allocation9 [shape = 's32[1]{0}', space=sflag, size = 0x4, scoped, tag = 'scoped memory for tpu_custom_call.1']
            %p281 = scmp.lt.u32.totalorder 8, 8
            %p282 = pneg %p281
            // Predicated region
            $region73: #{tpu_custom_call.1} parent=72 // pred_check
              _
            $region74: #{tpu_custom_call.1} parent=72 // pred_check_branch
              %284 = sbr.rel (%p281) target = $region76
            $region75: #{tpu_custom_call.1} parent=72 // pred_region
              %s299 = sand.u32 8, 7
              %p300 = scmp.eq.s32.totalorder %s299, 0
              // Predicated region
              $region88: #{tpu_custom_call.1} parent=75 // pred_check
                %p301 = pneg %p300
              $region89: #{tpu_custom_call.1} parent=75 // pred_check_branch
                %303 = sbr.rel (%p301) target = $region91
              $region90: #{tpu_custom_call.1} parent=75 // pred_region
                loop: start=0, step=1, limit=1
                $region92: #{tpu_custom_call.1} parent=90 // loop_pre_header
                  _
                $region93: #{tpu_custom_call.1} parent=90 // loop_header
                  %s305 = sphi 0, %s309
                  %p306 = scmp.ge.s32.totalorder %s305, 1
                  %s310 = sphi %s4, %s4
                  %s311 = sphi [#allocation3], [#allocation3]
                $region94: #{tpu_custom_call.1} parent=90 // loop_header_branch
                  %308 = sbr.rel (%p306) target = $region98
                $region95: #{tpu_custom_call.1} parent=90 // loop_body
                  %v312 = vld [vmem:[%s310] sm:$0xff]
                  %313 = vst [vmem:[%s311] sm:$0xff] %v312
                $region96: #{tpu_custom_call.1} parent=90 // loop_footer
                  %s309 = sadd.s32 1, %s305
                $region97: #{tpu_custom_call.1} parent=90 // loop_footer_branch
                  %304 = sbr.rel target = $region93
                $region98: #{tpu_custom_call.1} parent=90 // loop_exit
                  _
              $region91: #{tpu_custom_call.1} parent=75 // pred_fallthru
                _
              %p314 = pneg %p300
              // Predicated region
              $region99: #{tpu_custom_call.1} parent=75 // pred_check
                _
              $region100: #{tpu_custom_call.1} parent=75 // pred_check_branch
                %316 = sbr.rel (%p300) target = $region102
              $region101: #{tpu_custom_call.1} parent=75 // pred_region
                %s317 = sand.u32 8, 7
              $region102: #{tpu_custom_call.1} parent=75 // pred_fallthru
                _
            $region76: #{tpu_custom_call.1} parent=72 // pred_fallthru
              _
            // Predicated region
            $region77: #{tpu_custom_call.1} parent=72 // pred_check
              %p285 = pneg %p281
            $region78: #{tpu_custom_call.1} parent=72 // pred_check_branch
              %287 = sbr.rel (%p285) target = $region80
            $region79: #{tpu_custom_call.1} parent=72 // pred_region
              %s288 = sshllo.u32 0, 8
              loop: start=0, step=1, limit=1
              $region81: #{tpu_custom_call.1} parent=79 // loop_pre_header
                _
              $region82: #{tpu_custom_call.1} parent=79 // loop_header
                %s290 = sphi 0, %s294
                %p291 = scmp.ge.s32.totalorder %s290, 1
                %s295 = sphi %s4, %s4
                %s296 = sphi [#allocation3], [#allocation3]
              $region83: #{tpu_custom_call.1} parent=79 // loop_header_branch
                %293 = sbr.rel (%p291) target = $region87
              $region84: #{tpu_custom_call.1} parent=79 // loop_body
                %v297 = vld [vmem:[%s295] sm:%s288]
                %298 = vst [vmem:[%s296] sm:%s288] %v297
              $region85: #{tpu_custom_call.1} parent=79 // loop_footer
                %s294 = sadd.s32 1, %s290
              $region86: #{tpu_custom_call.1} parent=79 // loop_footer_branch
                %289 = sbr.rel target = $region82
              $region87: #{tpu_custom_call.1} parent=79 // loop_exit
                _
            $region80: #{tpu_custom_call.1} parent=72 // pred_fallthru
              _
            // Predicated region
            $region103: #{tpu_custom_call.1} parent=72 // pred_check
              _
            $region104: #{tpu_custom_call.1} parent=72 // pred_check_branch
              %320 = sbr.rel (0) target = $region106
            $region105: #{tpu_custom_call.1} parent=72 // pred_region
              %321 = vsyncadd [#allocation9], 128
            $region106: #{tpu_custom_call.1} parent=72 // pred_fallthru
              _
            %s322 = smul.u32 8, 1
            %s323 = sshll.u32 %s322, 4
            %324 = dma.done [#allocation9], %s323
          %325 = vst [vmem:[#allocation4] sm:$0x1] 0.0
        $region36: #{tpu_custom_call.1} parent=31 // pred_fallthru
          _
        %v326 = vld [vmem:[%s219] sm:$0xff]
        %v327 = vld [vmem:[%s219 + $0x8] sm:$0xff]
        %v328 = vld [vmem:[%s219 + $0x10] sm:$0xff]
        %v329 = vld [vmem:[%s219 + $0x18] sm:$0xff]
        %v330 = vld [vmem:[%s219 + $0x20] sm:$0xff]
        %v331 = vld [vmem:[%s219 + $0x28] sm:$0xff]
        %v332 = vld [vmem:[%s219 + $0x30] sm:$0xff]
        %v333 = vld [vmem:[%s219 + $0x38] sm:$0xff]
        %v334 = vld [vmem:[%s224] sm:$0x1]
        %v335 = vld [vmem:[%s229] sm:$0x1]
        %v336 = vsub.f32 %v326, %v330
        %v337 = vsub.f32 %v327, %v331
        %v338 = vsub.f32 %v328, %v332
        %v339 = vsub.f32 %v329, %v333
        %v340 = vmul.f32 %v336, %v336
        %v341 = vmul.f32 %v337, %v337
        %v342 = vmul.f32 %v338, %v338
        %v343 = vmul.f32 %v339, %v339
        %v345 = vlaneseq
        %v346 = vshrl.u32 %v345, 7
        %v347 = vsub.s32 0, %v346
        %v348 = vrot.slane %v334, %v347
        %v350 = vmul.f32 %v340, %v348
        %v351 = vmul.f32 %v341, %v348
        %v352 = vmul.f32 %v342, %v348
        %v353 = vmul.f32 %v343, %v348
        %vm354 = vcmask 64512
        %v355 = vsel %vm354, %v350, 0.0
        %v356 = vsel %vm354, %v351, 0.0
        %v357 = vadd.f32 %v355, %v356
        %v358 = vsel %vm354, %v352, 0.0
        %v359 = vadd.f32 %v357, %v358
        %v360 = vsel %vm354, %v353, 0.0
        %v361 = vadd.f32 %v359, %v360
        %362 = vadd.xlane.f32.xlu0 %v361
        %v363 = vpop.xlane.xlu0 %362
        %v364 = vrot.slane %v363, 4
        %v365 = vadd.f32 %v363, %v364
        %v366 = vrot.slane %v365, 2
        %v367 = vadd.f32 %v365, %v366
        %v368 = vrot.slane %v367, 1
        %v369 = vadd.f32 %v367, %v368
        %s370 = vtos %v369
        %v371 = vld [vmem:[#allocation2] sm:$0xff]
        %v373 = vsel %vm354, %v326, 0
        %v376 = vsel %vm354, %v327, 0
        %v379 = vsel %vm354, %v328, 0
        %v382 = vsel %vm354, %v329, 0
        %v385 = vsel %vm354, %v330, 0
        %v388 = vsel %vm354, %v331, 0
        %v391 = vsel %vm354, %v332, 0
        %v394 = vsel %vm354, %v333, 0
        %396 = vmatprep.subr.mxu0 0.0
        %v397 = vand.u32 %v371, 4294901760
        %398 = vmatpush1.msra.mxu0 %v397
        %399 = vmatprep.subr.mxu0 0.0
        %400 = vmatpush1.msra.mxu0 0.0
        %401 = vmatprep.subr.mxu0 0.0
        %402 = vmatpush1.msra.mxu0 0.0
        %403 = vmatprep.subr.mxu0 0.0
        %404 = vmatpush1.msra.mxu0 0.0
        %405 = vmatprep.subr.mxu0 0.0
        %406 = vmatpush1.msra.mxu0 0.0
        %407 = vmatprep.subr.mxu0 0.0
        %408 = vmatpush1.msra.mxu0 0.0
        %409 = vmatprep.subr.mxu0 0.0
        %410 = vmatpush1.msra.mxu0 0.0
        %411 = vmatprep.subr.mxu0 0.0
        %412 = vmatpush1.msra.mxu0 0.0
        %413 = vmatprep.subr.mxu0 0.0
        %414 = vmatpush1.msra.mxu0 0.0
        %415 = vmatprep.subr.mxu0 0.0
        %416 = vmatpush1.msra.mxu0 0.0
        %417 = vmatprep.subr.mxu0 0.0
        %418 = vmatpush1.msra.mxu0 0.0
        %419 = vmatprep.subr.mxu0 0.0
        %420 = vmatpush1.msra.mxu0 0.0
        %421 = vmatprep.subr.mxu0 0.0
        %422 = vmatpush1.msra.mxu0 0.0
        %423 = vmatprep.subr.mxu0 0.0
        %424 = vmatpush1.msra.mxu0 0.0
        %425 = vmatprep.subr.mxu0 0.0
        %426 = vmatpush1.msra.mxu0 0.0
        %427 = vmatprep.subr.mxu0 0.0
        %428 = vmatpush1.msra.mxu0 0.0
        %429 = vmatprep.subr.mxu0 0.0
        %430 = vmatpush1.msra.mxu0 0.0
        %431 = vmatprep.subr.mxu0 0.0
        %432 = vmatpush1.msra.mxu0 0.0
        %433 = vmatprep.subr.mxu0 0.0
        %434 = vmatpush1.msra.mxu0 0.0
        %435 = vmatprep.subr.mxu0 0.0
        %436 = vmatpush1.msra.mxu0 0.0
        %437 = vmatprep.subr.mxu0 0.0
        %438 = vmatpush1.msra.mxu0 0.0
        %439 = vmatprep.subr.mxu0 0.0
        %440 = vmatpush1.msra.mxu0 0.0
        %441 = vmatprep.subr.mxu0 0.0
        %442 = vmatpush1.msra.mxu0 0.0
        %443 = vmatprep.subr.mxu0 0.0
        %444 = vmatpush1.msra.mxu0 0.0
        %445 = vmatprep.subr.mxu0 0.0
        %446 = vmatpush1.msra.mxu0 0.0
        %447 = vmatprep.subr.mxu0 0.0
        %448 = vmatpush1.msra.mxu0 0.0
        %449 = vmatprep.subr.mxu0 0.0
        %450 = vmatpush1.msra.mxu0 0.0
        %451 = vmatprep.subr.mxu0 0.0
        %452 = vmatpush1.msra.mxu0 0.0
        %453 = vmatprep.subr.mxu0 0.0
        %454 = vmatpush1.msra.mxu0 0.0
        %455 = vmatprep.subr.mxu0 0.0
        %456 = vmatpush1.msra.mxu0 0.0
        %457 = vmatprep.subr.mxu0 0.0
        %458 = vmatpush1.msra.mxu0 0.0
        %459 = vmatprep.subr.mxu0 0.0
        %460 = vmatpush1.msra.mxu0 0.0
        %461 = vmatprep.mubr.f32.mxu0 0.0
        %v462 = vand.u32 %v373, 4294901760
        %v463 = vsub.f32 %v373, %v462
        %v464 = vand.u32 %v463, 4294901760
        %v465 = vsub.f32 %v463, %v464
        %v466 = vand.u32 %v465, 4294901760
        %467 = vmatmul.mubr.f32.gmra.mrb[0].mxu0 %v466
        %v468 = vpop.f32.mrb[0].mxu0
        %v469 = vadd.f32 0.0, %v468
        %v470 = vpop.f32.mrb[0].mxu0
        %471 = vmatprep.mubr.f32.mxu0 0.0
        %v472 = vand.u32 %v376, 4294901760
        %v473 = vsub.f32 %v376, %v472
        %v474 = vand.u32 %v473, 4294901760
        %v475 = vsub.f32 %v473, %v474
        %v476 = vand.u32 %v475, 4294901760
        %477 = vmatmul.mubr.f32.gmra.mrb[0].mxu0 %v476
        %v478 = vpop.f32.mrb[0].mxu0
        %v479 = vadd.f32 0.0, %v478
        %v480 = vpop.f32.mrb[0].mxu0
        %481 = vmatprep.mubr.f32.mxu0 0.0
        %v482 = vand.u32 %v379, 4294901760
        %v483 = vsub.f32 %v379, %v482
        %v484 = vand.u32 %v483, 4294901760
        %v485 = vsub.f32 %v483, %v484
        %v486 = vand.u32 %v485, 4294901760
        %487 = vmatmul.mubr.f32.gmra.mrb[0].mxu0 %v486
        %v488 = vpop.f32.mrb[0].mxu0
        %v489 = vadd.f32 0.0, %v488
        %v490 = vpop.f32.mrb[0].mxu0
        %491 = vmatprep.mubr.f32.mxu0 0.0
        %v492 = vand.u32 %v382, 4294901760
        %v493 = vsub.f32 %v382, %v492
        %v494 = vand.u32 %v493, 4294901760
        %v495 = vsub.f32 %v493, %v494
        %v496 = vand.u32 %v495, 4294901760
        %497 = vmatmul.mubr.f32.gmra.mrb[0].mxu0 %v496
        %v498 = vpop.f32.mrb[0].mxu0
        %v499 = vadd.f32 0.0, %v498
        %v500 = vpop.f32.mrb[0].mxu0
        %501 = vmatprep.mubr.f32.mxu0 0.0
        %v502 = vand.u32 %v385, 4294901760
        %v503 = vsub.f32 %v385, %v502
        %v504 = vand.u32 %v503, 4294901760
        %v505 = vsub.f32 %v503, %v504
        %v506 = vand.u32 %v505, 4294901760
        %507 = vmatmul.mubr.f32.gmra.mrb[0].mxu0 %v506
        %v508 = vpop.f32.mrb[0].mxu0
        %v509 = vadd.f32 0.0, %v508
        %v510 = vpop.f32.mrb[0].mxu0
        %511 = vmatprep.mubr.f32.mxu0 0.0
        %v512 = vand.u32 %v388, 4294901760
        %v513 = vsub.f32 %v388, %v512
        %v514 = vand.u32 %v513, 4294901760
        %v515 = vsub.f32 %v513, %v514
        %v516 = vand.u32 %v515, 4294901760
        %517 = vmatmul.mubr.f32.gmra.mrb[0].mxu0 %v516
        %v518 = vpop.f32.mrb[0].mxu0
        %v519 = vadd.f32 0.0, %v518
        %v520 = vpop.f32.mrb[0].mxu0
        %521 = vmatprep.mubr.f32.mxu0 0.0
        %v522 = vand.u32 %v391, 4294901760
        %v523 = vsub.f32 %v391, %v522
        %v524 = vand.u32 %v523, 4294901760
        %v525 = vsub.f32 %v523, %v524
        %v526 = vand.u32 %v525, 4294901760
        %527 = vmatmul.mubr.f32.gmra.mrb[0].mxu0 %v526
        %v528 = vpop.f32.mrb[0].mxu0
        %v529 = vadd.f32 0.0, %v528
        %v530 = vpop.f32.mrb[0].mxu0
        %531 = vmatprep.mubr.f32.mxu0 0.0
        %v532 = vand.u32 %v394, 4294901760
        %v533 = vsub.f32 %v394, %v532
        %v534 = vand.u32 %v533, 4294901760
        %v535 = vsub.f32 %v533, %v534
        %v536 = vand.u32 %v535, 4294901760
        %537 = vmatmul.mubr.f32.gmra.mrb[0].mxu0 %v536
        %v538 = vpop.f32.mrb[0].mxu0
        %v539 = vadd.f32 0.0, %v538
        %v540 = vpop.f32.mrb[0].mxu0
        %541 = vdwg.mxu0
        %542 = vmatprep.subr.mxu0 0.0
        %v543 = vand.u32 %v371, 4294901760
        %v544 = vsub.f32 %v371, %v543
        %v545 = vand.u32 %v544, 4294901760
        %v546 = vsub.f32 %v544, %v545
        %v547 = vand.u32 %v546, 4294901760
        %548 = vmatpush1.msra.mxu0 %v547
        %549 = vmatprep.subr.mxu0 0.0
        %550 = vmatpush1.msra.mxu0 0.0
        %551 = vmatprep.subr.mxu0 0.0
        %552 = vmatpush1.msra.mxu0 0.0
        %553 = vmatprep.subr.mxu0 0.0
        %554 = vmatpush1.msra.mxu0 0.0
        %555 = vmatprep.subr.mxu0 0.0
        %556 = vmatpush1.msra.mxu0 0.0
        %557 = vmatprep.subr.mxu0 0.0
        %558 = vmatpush1.msra.mxu0 0.0
        %559 = vmatprep.subr.mxu0 0.0
        %560 = vmatpush1.msra.mxu0 0.0
        %561 = vmatprep.subr.mxu0 0.0
        %562 = vmatpush1.msra.mxu0 0.0
        %563 = vmatprep.subr.mxu0 0.0
        %564 = vmatpush1.msra.mxu0 0.0
        %565 = vmatprep.subr.mxu0 0.0
        %566 = vmatpush1.msra.mxu0 0.0
        %567 = vmatprep.subr.mxu0 0.0
        %568 = vmatpush1.msra.mxu0 0.0
        %569 = vmatprep.subr.mxu0 0.0
        %570 = vmatpush1.msra.mxu0 0.0
        %571 = vmatprep.subr.mxu0 0.0
        %572 = vmatpush1.msra.mxu0 0.0
        %573 = vmatprep.subr.mxu0 0.0
        %574 = vmatpush1.msra.mxu0 0.0
        %575 = vmatprep.subr.mxu0 0.0
        %576 = vmatpush1.msra.mxu0 0.0
        %577 = vmatprep.subr.mxu0 0.0
        %578 = vmatpush1.msra.mxu0 0.0
        %579 = vmatprep.subr.mxu0 0.0
        %580 = vmatpush1.msra.mxu0 0.0
        %581 = vmatprep.subr.mxu0 0.0
        %582 = vmatpush1.msra.mxu0 0.0
        %583 = vmatprep.subr.mxu0 0.0
        %584 = vmatpush1.msra.mxu0 0.0
        %585 = vmatprep.subr.mxu0 0.0
        %586 = vmatpush1.msra.mxu0 0.0
        %587 = vmatprep.subr.mxu0 0.0
        %588 = vmatpush1.msra.mxu0 0.0
        %589 = vmatprep.subr.mxu0 0.0
        %590 = vmatpush1.msra.mxu0 0.0
        %591 = vmatprep.subr.mxu0 0.0
        %592 = vmatpush1.msra.mxu0 0.0
        %593 = vmatprep.subr.mxu0 0.0
        %594 = vmatpush1.msra.mxu0 0.0
        %595 = vmatprep.subr.mxu0 0.0
        %596 = vmatpush1.msra.mxu0 0.0
        %597 = vmatprep.subr.mxu0 0.0
        %598 = vmatpush1.msra.mxu0 0.0
        %599 = vmatprep.subr.mxu0 0.0
        %600 = vmatpush1.msra.mxu0 0.0
        %601 = vmatprep.subr.mxu0 0.0
        %602 = vmatpush1.msra.mxu0 0.0
        %603 = vmatprep.subr.mxu0 0.0
        %604 = vmatpush1.msra.mxu0 0.0
        %605 = vmatprep.subr.mxu0 0.0
        %606 = vmatpush1.msra.mxu0 0.0
        %607 = vmatprep.subr.mxu0 0.0
        %608 = vmatpush1.msra.mxu0 0.0
        %609 = vmatprep.subr.mxu0 0.0
        %610 = vmatpush1.msra.mxu0 0.0
        %611 = vmatprep.mubr.f32.mxu0 0.0
        %v612 = vand.u32 %v373, 4294901760
        %613 = vmatmul.mubr.f32.gmra.mrb[0].mxu0 %v612
        %v614 = vpop.f32.mrb[0].mxu0
        %v615 = vadd.f32 %v469, %v614
        %v616 = vpop.f32.mrb[0].mxu0
        %617 = vmatprep.mubr.f32.mxu0 0.0
        %v618 = vand.u32 %v376, 4294901760
        %619 = vmatmul.mubr.f32.gmra.mrb[0].mxu0 %v618
        %v620 = vpop.f32.mrb[0].mxu0
        %v621 = vadd.f32 %v479, %v620
        %v622 = vpop.f32.mrb[0].mxu0
        %623 = vmatprep.mubr.f32.mxu0 0.0
        %v624 = vand.u32 %v379, 4294901760
        %625 = vmatmul.mubr.f32.gmra.mrb[0].mxu0 %v624
        %v626 = vpop.f32.mrb[0].mxu0
        %v627 = vadd.f32 %v489, %v626
        %v628 = vpop.f32.mrb[0].mxu0
        %629 = vmatprep.mubr.f32.mxu0 0.0
        %v630 = vand.u32 %v382, 4294901760
        %631 = vmatmul.mubr.f32.gmra.mrb[0].mxu0 %v630
        %v632 = vpop.f32.mrb[0].mxu0
        %v633 = vadd.f32 %v499, %v632
        %v634 = vpop.f32.mrb[0].mxu0
        %635 = vmatprep.mubr.f32.mxu0 0.0
        %v636 = vand.u32 %v385, 4294901760
        %637 = vmatmul.mubr.f32.gmra.mrb[0].mxu0 %v636
        %v638 = vpop.f32.mrb[0].mxu0
        %v639 = vadd.f32 %v509, %v638
        %v640 = vpop.f32.mrb[0].mxu0
        %641 = vmatprep.mubr.f32.mxu0 0.0
        %v642 = vand.u32 %v388, 4294901760
        %643 = vmatmul.mubr.f32.gmra.mrb[0].mxu0 %v642
        %v644 = vpop.f32.mrb[0].mxu0
        %v645 = vadd.f32 %v519, %v644
        %v646 = vpop.f32.mrb[0].mxu0
        %647 = vmatprep.mubr.f32.mxu0 0.0
        %v648 = vand.u32 %v391, 4294901760
        %649 = vmatmul.mubr.f32.gmra.mrb[0].mxu0 %v648
        %v650 = vpop.f32.mrb[0].mxu0
        %v651 = vadd.f32 %v529, %v650
        %v652 = vpop.f32.mrb[0].mxu0
        %653 = vmatprep.mubr.f32.mxu0 0.0
        %v654 = vand.u32 %v394, 4294901760
        %655 = vmatmul.mubr.f32.gmra.mrb[0].mxu0 %v654
        %v656 = vpop.f32.mrb[0].mxu0
        %v657 = vadd.f32 %v539, %v656
        %v658 = vpop.f32.mrb[0].mxu0
        %659 = vdwg.mxu0
        %660 = vmatprep.subr.mxu0 0.0
        %v661 = vand.u32 %v371, 4294901760
        %v662 = vsub.f32 %v371, %v661
        %663 = vmatpush1.msra.mxu0 %v662
        %664 = vmatprep.subr.mxu0 0.0
        %665 = vmatpush1.msra.mxu0 0.0
        %666 = vmatprep.subr.mxu0 0.0
        %667 = vmatpush1.msra.mxu0 0.0
        %668 = vmatprep.subr.mxu0 0.0
        %669 = vmatpush1.msra.mxu0 0.0
        %670 = vmatprep.subr.mxu0 0.0
        %671 = vmatpush1.msra.mxu0 0.0
        %672 = vmatprep.subr.mxu0 0.0
        %673 = vmatpush1.msra.mxu0 0.0
        %674 = vmatprep.subr.mxu0 0.0
        %675 = vmatpush1.msra.mxu0 0.0
        %676 = vmatprep.subr.mxu0 0.0
        %677 = vmatpush1.msra.mxu0 0.0
        %678 = vmatprep.subr.mxu0 0.0
        %679 = vmatpush1.msra.mxu0 0.0
        %680 = vmatprep.subr.mxu0 0.0
        %681 = vmatpush1.msra.mxu0 0.0
        %682 = vmatprep.subr.mxu0 0.0
        %683 = vmatpush1.msra.mxu0 0.0
        %684 = vmatprep.subr.mxu0 0.0
        %685 = vmatpush1.msra.mxu0 0.0
        %686 = vmatprep.subr.mxu0 0.0
        %687 = vmatpush1.msra.mxu0 0.0
        %688 = vmatprep.subr.mxu0 0.0
        %689 = vmatpush1.msra.mxu0 0.0
        %690 = vmatprep.subr.mxu0 0.0
        %691 = vmatpush1.msra.mxu0 0.0
        %692 = vmatprep.subr.mxu0 0.0
        %693 = vmatpush1.msra.mxu0 0.0
        %694 = vmatprep.subr.mxu0 0.0
        %695 = vmatpush1.msra.mxu0 0.0
        %696 = vmatprep.subr.mxu0 0.0
        %697 = vmatpush1.msra.mxu0 0.0
        %698 = vmatprep.subr.mxu0 0.0
        %699 = vmatpush1.msra.mxu0 0.0
        %700 = vmatprep.subr.mxu0 0.0
        %701 = vmatpush1.msra.mxu0 0.0
        %702 = vmatprep.subr.mxu0 0.0
        %703 = vmatpush1.msra.mxu0 0.0
        %704 = vmatprep.subr.mxu0 0.0
        %705 = vmatpush1.msra.mxu0 0.0
        %706 = vmatprep.subr.mxu0 0.0
        %707 = vmatpush1.msra.mxu0 0.0
        %708 = vmatprep.subr.mxu0 0.0
        %709 = vmatpush1.msra.mxu0 0.0
        %710 = vmatprep.subr.mxu0 0.0
        %711 = vmatpush1.msra.mxu0 0.0
        %712 = vmatprep.subr.mxu0 0.0
        %713 = vmatpush1.msra.mxu0 0.0
        %714 = vmatprep.subr.mxu0 0.0
        %715 = vmatpush1.msra.mxu0 0.0
        %716 = vmatprep.subr.mxu0 0.0
        %717 = vmatpush1.msra.mxu0 0.0
        %718 = vmatprep.subr.mxu0 0.0
        %719 = vmatpush1.msra.mxu0 0.0
        %720 = vmatprep.subr.mxu0 0.0
        %721 = vmatpush1.msra.mxu0 0.0
        %722 = vmatprep.subr.mxu0 0.0
        %723 = vmatpush1.msra.mxu0 0.0
        %724 = vmatprep.subr.mxu0 0.0
        %725 = vmatpush1.msra.mxu0 0.0
        %726 = vmatprep.mubr.f32.mxu0 0.0
        %v727 = vand.u32 %v373, 4294901760
        %v728 = vsub.f32 %v373, %v727
        %729 = vmatmul.mubr.f32.gmra.mrb[0].mxu0 %v728
        %v730 = vpop.f32.mrb[0].mxu0
        %v731 = vadd.f32 %v615, %v730
        %v732 = vpop.f32.mrb[0].mxu0
        %733 = vmatprep.mubr.f32.mxu0 0.0
        %v734 = vand.u32 %v376, 4294901760
        %v735 = vsub.f32 %v376, %v734
        %736 = vmatmul.mubr.f32.gmra.mrb[0].mxu0 %v735
        %v737 = vpop.f32.mrb[0].mxu0
        %v738 = vadd.f32 %v621, %v737
        %v739 = vpop.f32.mrb[0].mxu0
        %740 = vmatprep.mubr.f32.mxu0 0.0
        %v741 = vand.u32 %v379, 4294901760
        %v742 = vsub.f32 %v379, %v741
        %743 = vmatmul.mubr.f32.gmra.mrb[0].mxu0 %v742
        %v744 = vpop.f32.mrb[0].mxu0
        %v745 = vadd.f32 %v627, %v744
        %v746 = vpop.f32.mrb[0].mxu0
        %747 = vmatprep.mubr.f32.mxu0 0.0
        %v748 = vand.u32 %v382, 4294901760
        %v749 = vsub.f32 %v382, %v748
        %750 = vmatmul.mubr.f32.gmra.mrb[0].mxu0 %v749
        %v751 = vpop.f32.mrb[0].mxu0
        %v752 = vadd.f32 %v633, %v751
        %v753 = vpop.f32.mrb[0].mxu0
        %754 = vmatprep.mubr.f32.mxu0 0.0
        %v755 = vand.u32 %v385, 4294901760
        %v756 = vsub.f32 %v385, %v755
        %757 = vmatmul.mubr.f32.gmra.mrb[0].mxu0 %v756
        %v758 = vpop.f32.mrb[0].mxu0
        %v759 = vadd.f32 %v639, %v758
        %v760 = vpop.f32.mrb[0].mxu0
        %761 = vmatprep.mubr.f32.mxu0 0.0
        %v762 = vand.u32 %v388, 4294901760
        %v763 = vsub.f32 %v388, %v762
        %764 = vmatmul.mubr.f32.gmra.mrb[0].mxu0 %v763
        %v765 = vpop.f32.mrb[0].mxu0
        %v766 = vadd.f32 %v645, %v765
        %v767 = vpop.f32.mrb[0].mxu0
        %768 = vmatprep.mubr.f32.mxu0 0.0
        %v769 = vand.u32 %v391, 4294901760
        %v770 = vsub.f32 %v391, %v769
        %771 = vmatmul.mubr.f32.gmra.mrb[0].mxu0 %v770
        %v772 = vpop.f32.mrb[0].mxu0
        %v773 = vadd.f32 %v651, %v772
        %v774 = vpop.f32.mrb[0].mxu0
        %775 = vmatprep.mubr.f32.mxu0 0.0
        %v776 = vand.u32 %v394, 4294901760
        %v777 = vsub.f32 %v394, %v776
        %778 = vmatmul.mubr.f32.gmra.mrb[0].mxu0 %v777
        %v779 = vpop.f32.mrb[0].mxu0
        %v780 = vadd.f32 %v657, %v779
        %v781 = vpop.f32.mrb[0].mxu0
        %782 = vdwg.mxu0
        %783 = vmatprep.subr.mxu0 0.0
        %v784 = vand.u32 %v371, 4294901760
        %785 = vmatpush1.msra.mxu0 %v784
        %786 = vmatprep.subr.mxu0 0.0
        %787 = vmatpush1.msra.mxu0 0.0
        %788 = vmatprep.subr.mxu0 0.0
        %789 = vmatpush1.msra.mxu0 0.0
        %790 = vmatprep.subr.mxu0 0.0
        %791 = vmatpush1.msra.mxu0 0.0
        %792 = vmatprep.subr.mxu0 0.0
        %793 = vmatpush1.msra.mxu0 0.0
        %794 = vmatprep.subr.mxu0 0.0
        %795 = vmatpush1.msra.mxu0 0.0
        %796 = vmatprep.subr.mxu0 0.0
        %797 = vmatpush1.msra.mxu0 0.0
        %798 = vmatprep.subr.mxu0 0.0
        %799 = vmatpush1.msra.mxu0 0.0
        %800 = vmatprep.subr.mxu0 0.0
        %801 = vmatpush1.msra.mxu0 0.0
        %802 = vmatprep.subr.mxu0 0.0
        %803 = vmatpush1.msra.mxu0 0.0
        %804 = vmatprep.subr.mxu0 0.0
        %805 = vmatpush1.msra.mxu0 0.0
        %806 = vmatprep.subr.mxu0 0.0
        %807 = vmatpush1.msra.mxu0 0.0
        %808 = vmatprep.subr.mxu0 0.0
        %809 = vmatpush1.msra.mxu0 0.0
        %810 = vmatprep.subr.mxu0 0.0
        %811 = vmatpush1.msra.mxu0 0.0
        %812 = vmatprep.subr.mxu0 0.0
        %813 = vmatpush1.msra.mxu0 0.0
        %814 = vmatprep.subr.mxu0 0.0
        %815 = vmatpush1.msra.mxu0 0.0
        %816 = vmatprep.subr.mxu0 0.0
        %817 = vmatpush1.msra.mxu0 0.0
        %818 = vmatprep.subr.mxu0 0.0
        %819 = vmatpush1.msra.mxu0 0.0
        %820 = vmatprep.subr.mxu0 0.0
        %821 = vmatpush1.msra.mxu0 0.0
        %822 = vmatprep.subr.mxu0 0.0
        %823 = vmatpush1.msra.mxu0 0.0
        %824 = vmatprep.subr.mxu0 0.0
        %825 = vmatpush1.msra.mxu0 0.0
        %826 = vmatprep.subr.mxu0 0.0
        %827 = vmatpush1.msra.mxu0 0.0
        %828 = vmatprep.subr.mxu0 0.0
        %829 = vmatpush1.msra.mxu0 0.0
        %830 = vmatprep.subr.mxu0 0.0
        %831 = vmatpush1.msra.mxu0 0.0
        %832 = vmatprep.subr.mxu0 0.0
        %833 = vmatpush1.msra.mxu0 0.0
        %834 = vmatprep.subr.mxu0 0.0
        %835 = vmatpush1.msra.mxu0 0.0
        %836 = vmatprep.subr.mxu0 0.0
        %837 = vmatpush1.msra.mxu0 0.0
        %838 = vmatprep.subr.mxu0 0.0
        %839 = vmatpush1.msra.mxu0 0.0
        %840 = vmatprep.subr.mxu0 0.0
        %841 = vmatpush1.msra.mxu0 0.0
        %842 = vmatprep.subr.mxu0 0.0
        %843 = vmatpush1.msra.mxu0 0.0
        %844 = vmatprep.subr.mxu0 0.0
        %845 = vmatpush1.msra.mxu0 0.0
        %846 = vmatprep.subr.mxu0 0.0
        %847 = vmatpush1.msra.mxu0 0.0
        %848 = vmatprep.mubr.f32.mxu0 0.0
        %v849 = vand.u32 %v373, 4294901760
        %v850 = vsub.f32 %v373, %v849
        %v851 = vand.u32 %v850, 4294901760
        %852 = vmatmul.mubr.f32.gmra.mrb[0].mxu0 %v851
        %v853 = vpop.f32.mrb[0].mxu0
        %v854 = vadd.f32 %v731, %v853
        %v855 = vpop.f32.mrb[0].mxu0
        %856 = vmatprep.mubr.f32.mxu0 0.0
        %v857 = vand.u32 %v376, 4294901760
        %v858 = vsub.f32 %v376, %v857
        %v859 = vand.u32 %v858, 4294901760
        %860 = vmatmul.mubr.f32.gmra.mrb[0].mxu0 %v859
        %v861 = vpop.f32.mrb[0].mxu0
        %v862 = vadd.f32 %v738, %v861
        %v863 = vpop.f32.mrb[0].mxu0
        %864 = vmatprep.mubr.f32.mxu0 0.0
        %v865 = vand.u32 %v379, 4294901760
        %v866 = vsub.f32 %v379, %v865
        %v867 = vand.u32 %v866, 4294901760
        %868 = vmatmul.mubr.f32.gmra.mrb[0].mxu0 %v867
        %v869 = vpop.f32.mrb[0].mxu0
        %v870 = vadd.f32 %v745, %v869
        %v871 = vpop.f32.mrb[0].mxu0
        %872 = vmatprep.mubr.f32.mxu0 0.0
        %v873 = vand.u32 %v382, 4294901760
        %v874 = vsub.f32 %v382, %v873
        %v875 = vand.u32 %v874, 4294901760
        %876 = vmatmul.mubr.f32.gmra.mrb[0].mxu0 %v875
        %v877 = vpop.f32.mrb[0].mxu0
        %v878 = vadd.f32 %v752, %v877
        %v879 = vpop.f32.mrb[0].mxu0
        %880 = vmatprep.mubr.f32.mxu0 0.0
        %v881 = vand.u32 %v385, 4294901760
        %v882 = vsub.f32 %v385, %v881
        %v883 = vand.u32 %v882, 4294901760
        %884 = vmatmul.mubr.f32.gmra.mrb[0].mxu0 %v883
        %v885 = vpop.f32.mrb[0].mxu0
        %v886 = vadd.f32 %v759, %v885
        %v887 = vpop.f32.mrb[0].mxu0
        %888 = vmatprep.mubr.f32.mxu0 0.0
        %v889 = vand.u32 %v388, 4294901760
        %v890 = vsub.f32 %v388, %v889
        %v891 = vand.u32 %v890, 4294901760
        %892 = vmatmul.mubr.f32.gmra.mrb[0].mxu0 %v891
        %v893 = vpop.f32.mrb[0].mxu0
        %v894 = vadd.f32 %v766, %v893
        %v895 = vpop.f32.mrb[0].mxu0
        %896 = vmatprep.mubr.f32.mxu0 0.0
        %v897 = vand.u32 %v391, 4294901760
        %v898 = vsub.f32 %v391, %v897
        %v899 = vand.u32 %v898, 4294901760
        %900 = vmatmul.mubr.f32.gmra.mrb[0].mxu0 %v899
        %v901 = vpop.f32.mrb[0].mxu0
        %v902 = vadd.f32 %v773, %v901
        %v903 = vpop.f32.mrb[0].mxu0
        %904 = vmatprep.mubr.f32.mxu0 0.0
        %v905 = vand.u32 %v394, 4294901760
        %v906 = vsub.f32 %v394, %v905
        %v907 = vand.u32 %v906, 4294901760
        %908 = vmatmul.mubr.f32.gmra.mrb[0].mxu0 %v907
        %v909 = vpop.f32.mrb[0].mxu0
        %v910 = vadd.f32 %v780, %v909
        %v911 = vpop.f32.mrb[0].mxu0
        %912 = vdwg.mxu0
        %913 = vmatprep.subr.mxu0 0.0
        %v914 = vand.u32 %v371, 4294901760
        %v915 = vsub.f32 %v371, %v914
        %v916 = vand.u32 %v915, 4294901760
        %917 = vmatpush1.msra.mxu0 %v916
        %918 = vmatprep.subr.mxu0 0.0
        %919 = vmatpush1.msra.mxu0 0.0
        %920 = vmatprep.subr.mxu0 0.0
        %921 = vmatpush1.msra.mxu0 0.0
        %922 = vmatprep.subr.mxu0 0.0
        %923 = vmatpush1.msra.mxu0 0.0
        %924 = vmatprep.subr.mxu0 0.0
        %925 = vmatpush1.msra.mxu0 0.0
        %926 = vmatprep.subr.mxu0 0.0
        %927 = vmatpush1.msra.mxu0 0.0
        %928 = vmatprep.subr.mxu0 0.0
        %929 = vmatpush1.msra.mxu0 0.0
        %930 = vmatprep.subr.mxu0 0.0
        %931 = vmatpush1.msra.mxu0 0.0
        %932 = vmatprep.subr.mxu0 0.0
        %933 = vmatpush1.msra.mxu0 0.0
        %934 = vmatprep.subr.mxu0 0.0
        %935 = vmatpush1.msra.mxu0 0.0
        %936 = vmatprep.subr.mxu0 0.0
        %937 = vmatpush1.msra.mxu0 0.0
        %938 = vmatprep.subr.mxu0 0.0
        %939 = vmatpush1.msra.mxu0 0.0
        %940 = vmatprep.subr.mxu0 0.0
        %941 = vmatpush1.msra.mxu0 0.0
        %942 = vmatprep.subr.mxu0 0.0
        %943 = vmatpush1.msra.mxu0 0.0
        %944 = vmatprep.subr.mxu0 0.0
        %945 = vmatpush1.msra.mxu0 0.0
        %946 = vmatprep.subr.mxu0 0.0
        %947 = vmatpush1.msra.mxu0 0.0
        %948 = vmatprep.subr.mxu0 0.0
        %949 = vmatpush1.msra.mxu0 0.0
        %950 = vmatprep.subr.mxu0 0.0
        %951 = vmatpush1.msra.mxu0 0.0
        %952 = vmatprep.subr.mxu0 0.0
        %953 = vmatpush1.msra.mxu0 0.0
        %954 = vmatprep.subr.mxu0 0.0
        %955 = vmatpush1.msra.mxu0 0.0
        %956 = vmatprep.subr.mxu0 0.0
        %957 = vmatpush1.msra.mxu0 0.0
        %958 = vmatprep.subr.mxu0 0.0
        %959 = vmatpush1.msra.mxu0 0.0
        %960 = vmatprep.subr.mxu0 0.0
        %961 = vmatpush1.msra.mxu0 0.0
        %962 = vmatprep.subr.mxu0 0.0
        %963 = vmatpush1.msra.mxu0 0.0
        %964 = vmatprep.subr.mxu0 0.0
        %965 = vmatpush1.msra.mxu0 0.0
        %966 = vmatprep.subr.mxu0 0.0
        %967 = vmatpush1.msra.mxu0 0.0
        %968 = vmatprep.subr.mxu0 0.0
        %969 = vmatpush1.msra.mxu0 0.0
        %970 = vmatprep.subr.mxu0 0.0
        %971 = vmatpush1.msra.mxu0 0.0
        %972 = vmatprep.subr.mxu0 0.0
        %973 = vmatpush1.msra.mxu0 0.0
        %974 = vmatprep.subr.mxu0 0.0
        %975 = vmatpush1.msra.mxu0 0.0
        %976 = vmatprep.subr.mxu0 0.0
        %977 = vmatpush1.msra.mxu0 0.0
        %978 = vmatprep.subr.mxu0 0.0
        %979 = vmatpush1.msra.mxu0 0.0
        %980 = vmatprep.mubr.f32.mxu0 0.0
        %v981 = vand.u32 %v373, 4294901760
        %982 = vmatmul.mubr.f32.gmra.mrb[0].mxu0 %v981
        %v983 = vpop.f32.mrb[0].mxu0
        %v984 = vadd.f32 %v854, %v983
        %v985 = vpop.f32.mrb[0].mxu0
        %986 = vmatprep.mubr.f32.mxu0 0.0
        %v987 = vand.u32 %v376, 4294901760
        %988 = vmatmul.mubr.f32.gmra.mrb[0].mxu0 %v987
        %v989 = vpop.f32.mrb[0].mxu0
        %v990 = vadd.f32 %v862, %v989
        %v991 = vpop.f32.mrb[0].mxu0
        %992 = vmatprep.mubr.f32.mxu0 0.0
        %v993 = vand.u32 %v379, 4294901760
        %994 = vmatmul.mubr.f32.gmra.mrb[0].mxu0 %v993
        %v995 = vpop.f32.mrb[0].mxu0
        %v996 = vadd.f32 %v870, %v995
        %v997 = vpop.f32.mrb[0].mxu0
        %998 = vmatprep.mubr.f32.mxu0 0.0
        %v999 = vand.u32 %v382, 4294901760
        %1000 = vmatmul.mubr.f32.gmra.mrb[0].mxu0 %v999
        %v1001 = vpop.f32.mrb[0].mxu0
        %v1002 = vadd.f32 %v878, %v1001
        %v1003 = vpop.f32.mrb[0].mxu0
        %1004 = vmatprep.mubr.f32.mxu0 0.0
        %v1005 = vand.u32 %v385, 4294901760
        %1006 = vmatmul.mubr.f32.gmra.mrb[0].mxu0 %v1005
        %v1007 = vpop.f32.mrb[0].mxu0
        %v1008 = vadd.f32 %v886, %v1007
        %v1009 = vpop.f32.mrb[0].mxu0
        %1010 = vmatprep.mubr.f32.mxu0 0.0
        %v1011 = vand.u32 %v388, 4294901760
        %1012 = vmatmul.mubr.f32.gmra.mrb[0].mxu0 %v1011
        %v1013 = vpop.f32.mrb[0].mxu0
        %v1014 = vadd.f32 %v894, %v1013
        %v1015 = vpop.f32.mrb[0].mxu0
        %1016 = vmatprep.mubr.f32.mxu0 0.0
        %v1017 = vand.u32 %v391, 4294901760
        %1018 = vmatmul.mubr.f32.gmra.mrb[0].mxu0 %v1017
        %v1019 = vpop.f32.mrb[0].mxu0
        %v1020 = vadd.f32 %v902, %v1019
        %v1021 = vpop.f32.mrb[0].mxu0
        %1022 = vmatprep.mubr.f32.mxu0 0.0
        %v1023 = vand.u32 %v394, 4294901760
        %1024 = vmatmul.mubr.f32.gmra.mrb[0].mxu0 %v1023
        %v1025 = vpop.f32.mrb[0].mxu0
        %v1026 = vadd.f32 %v910, %v1025
        %v1027 = vpop.f32.mrb[0].mxu0
        %1028 = vdwg.mxu0
        %1029 = vmatprep.subr.mxu0 0.0
        %v1030 = vand.u32 %v371, 4294901760
        %1031 = vmatpush1.msra.mxu0 %v1030
        %1032 = vmatprep.subr.mxu0 0.0
        %1033 = vmatpush1.msra.mxu0 0.0
        %1034 = vmatprep.subr.mxu0 0.0
        %1035 = vmatpush1.msra.mxu0 0.0
        %1036 = vmatprep.subr.mxu0 0.0
        %1037 = vmatpush1.msra.mxu0 0.0
        %1038 = vmatprep.subr.mxu0 0.0
        %1039 = vmatpush1.msra.mxu0 0.0
        %1040 = vmatprep.subr.mxu0 0.0
        %1041 = vmatpush1.msra.mxu0 0.0
        %1042 = vmatprep.subr.mxu0 0.0
        %1043 = vmatpush1.msra.mxu0 0.0
        %1044 = vmatprep.subr.mxu0 0.0
        %1045 = vmatpush1.msra.mxu0 0.0
        %1046 = vmatprep.subr.mxu0 0.0
        %1047 = vmatpush1.msra.mxu0 0.0
        %1048 = vmatprep.subr.mxu0 0.0
        %1049 = vmatpush1.msra.mxu0 0.0
        %1050 = vmatprep.subr.mxu0 0.0
        %1051 = vmatpush1.msra.mxu0 0.0
        %1052 = vmatprep.subr.mxu0 0.0
        %1053 = vmatpush1.msra.mxu0 0.0
        %1054 = vmatprep.subr.mxu0 0.0
        %1055 = vmatpush1.msra.mxu0 0.0
        %1056 = vmatprep.subr.mxu0 0.0
        %1057 = vmatpush1.msra.mxu0 0.0
        %1058 = vmatprep.subr.mxu0 0.0
        %1059 = vmatpush1.msra.mxu0 0.0
        %1060 = vmatprep.subr.mxu0 0.0
        %1061 = vmatpush1.msra.mxu0 0.0
        %1062 = vmatprep.subr.mxu0 0.0
        %1063 = vmatpush1.msra.mxu0 0.0
        %1064 = vmatprep.subr.mxu0 0.0
        %1065 = vmatpush1.msra.mxu0 0.0
        %1066 = vmatprep.subr.mxu0 0.0
        %1067 = vmatpush1.msra.mxu0 0.0
        %1068 = vmatprep.subr.mxu0 0.0
        %1069 = vmatpush1.msra.mxu0 0.0
        %1070 = vmatprep.subr.mxu0 0.0
        %1071 = vmatpush1.msra.mxu0 0.0
        %1072 = vmatprep.subr.mxu0 0.0
        %1073 = vmatpush1.msra.mxu0 0.0
        %1074 = vmatprep.subr.mxu0 0.0
        %1075 = vmatpush1.msra.mxu0 0.0
        %1076 = vmatprep.subr.mxu0 0.0
        %1077 = vmatpush1.msra.mxu0 0.0
        %1078 = vmatprep.subr.mxu0 0.0
        %1079 = vmatpush1.msra.mxu0 0.0
        %1080 = vmatprep.subr.mxu0 0.0
        %1081 = vmatpush1.msra.mxu0 0.0
        %1082 = vmatprep.subr.mxu0 0.0
        %1083 = vmatpush1.msra.mxu0 0.0
        %1084 = vmatprep.subr.mxu0 0.0
        %1085 = vmatpush1.msra.mxu0 0.0
        %1086 = vmatprep.subr.mxu0 0.0
        %1087 = vmatpush1.msra.mxu0 0.0
        %1088 = vmatprep.subr.mxu0 0.0
        %1089 = vmatpush1.msra.mxu0 0.0
        %1090 = vmatprep.subr.mxu0 0.0
        %1091 = vmatpush1.msra.mxu0 0.0
        %1092 = vmatprep.subr.mxu0 0.0
        %1093 = vmatpush1.msra.mxu0 0.0
        %1094 = vmatprep.mubr.f32.mxu0 0.0
        %v1095 = vand.u32 %v373, 4294901760
        %1096 = vmatmul.mubr.f32.gmra.mrb[0].mxu0 %v1095
        %v1097 = vpop.f32.mrb[0].mxu0
        %v1098 = vadd.f32 %v984, %v1097
        %v1099 = vpop.f32.mrb[0].mxu0
        %1100 = vmatprep.mubr.f32.mxu0 0.0
        %v1101 = vand.u32 %v376, 4294901760
        %1102 = vmatmul.mubr.f32.gmra.mrb[0].mxu0 %v1101
        %v1103 = vpop.f32.mrb[0].mxu0
        %v1104 = vadd.f32 %v990, %v1103
        %v1105 = vpop.f32.mrb[0].mxu0
        %1106 = vmatprep.mubr.f32.mxu0 0.0
        %v1107 = vand.u32 %v379, 4294901760
        %1108 = vmatmul.mubr.f32.gmra.mrb[0].mxu0 %v1107
        %v1109 = vpop.f32.mrb[0].mxu0
        %v1110 = vadd.f32 %v996, %v1109
        %v1111 = vpop.f32.mrb[0].mxu0
        %1112 = vmatprep.mubr.f32.mxu0 0.0
        %v1113 = vand.u32 %v382, 4294901760
        %1114 = vmatmul.mubr.f32.gmra.mrb[0].mxu0 %v1113
        %v1115 = vpop.f32.mrb[0].mxu0
        %v1116 = vadd.f32 %v1002, %v1115
        %v1117 = vpop.f32.mrb[0].mxu0
        %1118 = vmatprep.mubr.f32.mxu0 0.0
        %v1119 = vand.u32 %v385, 4294901760
        %1120 = vmatmul.mubr.f32.gmra.mrb[0].mxu0 %v1119
        %v1121 = vpop.f32.mrb[0].mxu0
        %v1122 = vadd.f32 %v1008, %v1121
        %v1123 = vpop.f32.mrb[0].mxu0
        %1124 = vmatprep.mubr.f32.mxu0 0.0
        %v1125 = vand.u32 %v388, 4294901760
        %1126 = vmatmul.mubr.f32.gmra.mrb[0].mxu0 %v1125
        %v1127 = vpop.f32.mrb[0].mxu0
        %v1128 = vadd.f32 %v1014, %v1127
        %v1129 = vpop.f32.mrb[0].mxu0
        %1130 = vmatprep.mubr.f32.mxu0 0.0
        %v1131 = vand.u32 %v391, 4294901760
        %1132 = vmatmul.mubr.f32.gmra.mrb[0].mxu0 %v1131
        %v1133 = vpop.f32.mrb[0].mxu0
        %v1134 = vadd.f32 %v1020, %v1133
        %v1135 = vpop.f32.mrb[0].mxu0
        %1136 = vmatprep.mubr.f32.mxu0 0.0
        %v1137 = vand.u32 %v394, 4294901760
        %1138 = vmatmul.mubr.f32.gmra.mrb[0].mxu0 %v1137
        %v1139 = vpop.f32.mrb[0].mxu0
        %v1140 = vadd.f32 %v1026, %v1139
        %v1141 = vpop.f32.mrb[0].mxu0
        %1142 = vdwg.mxu0
        %v1143 = vld [vmem:[#allocation3] sm:$0xff]
        %1144 = vmatprep.subr.mxu0 0.0
        %v1145 = vand.u32 %v1143, 4294901760
        %1146 = vmatpush1.msra.mxu0 %v1145
        %1147 = vmatprep.subr.mxu0 0.0
        %1148 = vmatpush1.msra.mxu0 0.0
        %1149 = vmatprep.subr.mxu0 0.0
        %1150 = vmatpush1.msra.mxu0 0.0
        %1151 = vmatprep.subr.mxu0 0.0
        %1152 = vmatpush1.msra.mxu0 0.0
        %1153 = vmatprep.subr.mxu0 0.0
        %1154 = vmatpush1.msra.mxu0 0.0
        %1155 = vmatprep.subr.mxu0 0.0
        %1156 = vmatpush1.msra.mxu0 0.0
        %1157 = vmatprep.subr.mxu0 0.0
        %1158 = vmatpush1.msra.mxu0 0.0
        %1159 = vmatprep.subr.mxu0 0.0
        %1160 = vmatpush1.msra.mxu0 0.0
        %1161 = vmatprep.subr.mxu0 0.0
        %1162 = vmatpush1.msra.mxu0 0.0
        %1163 = vmatprep.subr.mxu0 0.0
        %1164 = vmatpush1.msra.mxu0 0.0
        %1165 = vmatprep.subr.mxu0 0.0
        %1166 = vmatpush1.msra.mxu0 0.0
        %1167 = vmatprep.subr.mxu0 0.0
        %1168 = vmatpush1.msra.mxu0 0.0
        %1169 = vmatprep.subr.mxu0 0.0
        %1170 = vmatpush1.msra.mxu0 0.0
        %1171 = vmatprep.subr.mxu0 0.0
        %1172 = vmatpush1.msra.mxu0 0.0
        %1173 = vmatprep.subr.mxu0 0.0
        %1174 = vmatpush1.msra.mxu0 0.0
        %1175 = vmatprep.subr.mxu0 0.0
        %1176 = vmatpush1.msra.mxu0 0.0
        %1177 = vmatprep.subr.mxu0 0.0
        %1178 = vmatpush1.msra.mxu0 0.0
        %1179 = vmatprep.subr.mxu0 0.0
        %1180 = vmatpush1.msra.mxu0 0.0
        %1181 = vmatprep.subr.mxu0 0.0
        %1182 = vmatpush1.msra.mxu0 0.0
        %1183 = vmatprep.subr.mxu0 0.0
        %1184 = vmatpush1.msra.mxu0 0.0
        %1185 = vmatprep.subr.mxu0 0.0
        %1186 = vmatpush1.msra.mxu0 0.0
        %1187 = vmatprep.subr.mxu0 0.0
        %1188 = vmatpush1.msra.mxu0 0.0
        %1189 = vmatprep.subr.mxu0 0.0
        %1190 = vmatpush1.msra.mxu0 0.0
        %1191 = vmatprep.subr.mxu0 0.0
        %1192 = vmatpush1.msra.mxu0 0.0
        %1193 = vmatprep.subr.mxu0 0.0
        %1194 = vmatpush1.msra.mxu0 0.0
        %1195 = vmatprep.subr.mxu0 0.0
        %1196 = vmatpush1.msra.mxu0 0.0
        %1197 = vmatprep.subr.mxu0 0.0
        %1198 = vmatpush1.msra.mxu0 0.0
        %1199 = vmatprep.subr.mxu0 0.0
        %1200 = vmatpush1.msra.mxu0 0.0
        %1201 = vmatprep.subr.mxu0 0.0
        %1202 = vmatpush1.msra.mxu0 0.0
        %1203 = vmatprep.subr.mxu0 0.0
        %1204 = vmatpush1.msra.mxu0 0.0
        %1205 = vmatprep.subr.mxu0 0.0
        %1206 = vmatpush1.msra.mxu0 0.0
        %1207 = vmatprep.subr.mxu0 0.0
        %1208 = vmatpush1.msra.mxu0 0.0
        %1209 = vmatprep.mubr.f32.mxu0 0.0
        %v1210 = vand.u32 %v373, 4294901760
        %v1211 = vsub.f32 %v373, %v1210
        %v1212 = vand.u32 %v1211, 4294901760
        %v1213 = vsub.f32 %v1211, %v1212
        %v1214 = vand.u32 %v1213, 4294901760
        %1215 = vmatmul.mubr.f32.gmra.mrb[0].mxu0 %v1214
        %v1216 = vpop.f32.mrb[0].mxu0
        %v1217 = vadd.f32 0.0, %v1216
        %v1218 = vpop.f32.mrb[0].mxu0
        %1219 = vmatprep.mubr.f32.mxu0 0.0
        %v1220 = vand.u32 %v376, 4294901760
        %v1221 = vsub.f32 %v376, %v1220
        %v1222 = vand.u32 %v1221, 4294901760
        %v1223 = vsub.f32 %v1221, %v1222
        %v1224 = vand.u32 %v1223, 4294901760
        %1225 = vmatmul.mubr.f32.gmra.mrb[0].mxu0 %v1224
        %v1226 = vpop.f32.mrb[0].mxu0
        %v1227 = vadd.f32 0.0, %v1226
        %v1228 = vpop.f32.mrb[0].mxu0
        %1229 = vmatprep.mubr.f32.mxu0 0.0
        %v1230 = vand.u32 %v379, 4294901760
        %v1231 = vsub.f32 %v379, %v1230
        %v1232 = vand.u32 %v1231, 4294901760
        %v1233 = vsub.f32 %v1231, %v1232
        %v1234 = vand.u32 %v1233, 4294901760
        %1235 = vmatmul.mubr.f32.gmra.mrb[0].mxu0 %v1234
        %v1236 = vpop.f32.mrb[0].mxu0
        %v1237 = vadd.f32 0.0, %v1236
        %v1238 = vpop.f32.mrb[0].mxu0
        %1239 = vmatprep.mubr.f32.mxu0 0.0
        %v1240 = vand.u32 %v382, 4294901760
        %v1241 = vsub.f32 %v382, %v1240
        %v1242 = vand.u32 %v1241, 4294901760
        %v1243 = vsub.f32 %v1241, %v1242
        %v1244 = vand.u32 %v1243, 4294901760
        %1245 = vmatmul.mubr.f32.gmra.mrb[0].mxu0 %v1244
        %v1246 = vpop.f32.mrb[0].mxu0
        %v1247 = vadd.f32 0.0, %v1246
        %v1248 = vpop.f32.mrb[0].mxu0
        %1249 = vmatprep.mubr.f32.mxu0 0.0
        %v1250 = vand.u32 %v385, 4294901760
        %v1251 = vsub.f32 %v385, %v1250
        %v1252 = vand.u32 %v1251, 4294901760
        %v1253 = vsub.f32 %v1251, %v1252
        %v1254 = vand.u32 %v1253, 4294901760
        %1255 = vmatmul.mubr.f32.gmra.mrb[0].mxu0 %v1254
        %v1256 = vpop.f32.mrb[0].mxu0
        %v1257 = vadd.f32 0.0, %v1256
        %v1258 = vpop.f32.mrb[0].mxu0
        %1259 = vmatprep.mubr.f32.mxu0 0.0
        %v1260 = vand.u32 %v388, 4294901760
        %v1261 = vsub.f32 %v388, %v1260
        %v1262 = vand.u32 %v1261, 4294901760
        %v1263 = vsub.f32 %v1261, %v1262
        %v1264 = vand.u32 %v1263, 4294901760
        %1265 = vmatmul.mubr.f32.gmra.mrb[0].mxu0 %v1264
        %v1266 = vpop.f32.mrb[0].mxu0
        %v1267 = vadd.f32 0.0, %v1266
        %v1268 = vpop.f32.mrb[0].mxu0
        %1269 = vmatprep.mubr.f32.mxu0 0.0
        %v1270 = vand.u32 %v391, 4294901760
        %v1271 = vsub.f32 %v391, %v1270
        %v1272 = vand.u32 %v1271, 4294901760
        %v1273 = vsub.f32 %v1271, %v1272
        %v1274 = vand.u32 %v1273, 4294901760
        %1275 = vmatmul.mubr.f32.gmra.mrb[0].mxu0 %v1274
        %v1276 = vpop.f32.mrb[0].mxu0
        %v1277 = vadd.f32 0.0, %v1276
        %v1278 = vpop.f32.mrb[0].mxu0
        %1279 = vmatprep.mubr.f32.mxu0 0.0
        %v1280 = vand.u32 %v394, 4294901760
        %v1281 = vsub.f32 %v394, %v1280
        %v1282 = vand.u32 %v1281, 4294901760
        %v1283 = vsub.f32 %v1281, %v1282
        %v1284 = vand.u32 %v1283, 4294901760
        %1285 = vmatmul.mubr.f32.gmra.mrb[0].mxu0 %v1284
        %v1286 = vpop.f32.mrb[0].mxu0
        %v1287 = vadd.f32 0.0, %v1286
        %v1288 = vpop.f32.mrb[0].mxu0
        %1289 = vdwg.mxu0
        %1290 = vmatprep.subr.mxu0 0.0
        %v1291 = vand.u32 %v1143, 4294901760
        %v1292 = vsub.f32 %v1143, %v1291
        %v1293 = vand.u32 %v1292, 4294901760
        %v1294 = vsub.f32 %v1292, %v1293
        %v1295 = vand.u32 %v1294, 4294901760
        %1296 = vmatpush1.msra.mxu0 %v1295
        %1297 = vmatprep.subr.mxu0 0.0
        %1298 = vmatpush1.msra.mxu0 0.0
        %1299 = vmatprep.subr.mxu0 0.0
        %1300 = vmatpush1.msra.mxu0 0.0
        %1301 = vmatprep.subr.mxu0 0.0
        %1302 = vmatpush1.msra.mxu0 0.0
        %1303 = vmatprep.subr.mxu0 0.0
        %1304 = vmatpush1.msra.mxu0 0.0
        %1305 = vmatprep.subr.mxu0 0.0
        %1306 = vmatpush1.msra.mxu0 0.0
        %1307 = vmatprep.subr.mxu0 0.0
        %1308 = vmatpush1.msra.mxu0 0.0
        %1309 = vmatprep.subr.mxu0 0.0
        %1310 = vmatpush1.msra.mxu0 0.0
        %1311 = vmatprep.subr.mxu0 0.0
        %1312 = vmatpush1.msra.mxu0 0.0
        %1313 = vmatprep.subr.mxu0 0.0
        %1314 = vmatpush1.msra.mxu0 0.0
        %1315 = vmatprep.subr.mxu0 0.0
        %1316 = vmatpush1.msra.mxu0 0.0
        %1317 = vmatprep.subr.mxu0 0.0
        %1318 = vmatpush1.msra.mxu0 0.0
        %1319 = vmatprep.subr.mxu0 0.0
        %1320 = vmatpush1.msra.mxu0 0.0
        %1321 = vmatprep.subr.mxu0 0.0
        %1322 = vmatpush1.msra.mxu0 0.0
        %1323 = vmatprep.subr.mxu0 0.0
        %1324 = vmatpush1.msra.mxu0 0.0
        %1325 = vmatprep.subr.mxu0 0.0
        %1326 = vmatpush1.msra.mxu0 0.0
        %1327 = vmatprep.subr.mxu0 0.0
        %1328 = vmatpush1.msra.mxu0 0.0
        %1329 = vmatprep.subr.mxu0 0.0
        %1330 = vmatpush1.msra.mxu0 0.0
        %1331 = vmatprep.subr.mxu0 0.0
        %1332 = vmatpush1.msra.mxu0 0.0
        %1333 = vmatprep.subr.mxu0 0.0
        %1334 = vmatpush1.msra.mxu0 0.0
        %1335 = vmatprep.subr.mxu0 0.0
        %1336 = vmatpush1.msra.mxu0 0.0
        %1337 = vmatprep.subr.mxu0 0.0
        %1338 = vmatpush1.msra.mxu0 0.0
        %1339 = vmatprep.subr.mxu0 0.0
        %1340 = vmatpush1.msra.mxu0 0.0
        %1341 = vmatprep.subr.mxu0 0.0
        %1342 = vmatpush1.msra.mxu0 0.0
        %1343 = vmatprep.subr.mxu0 0.0
        %1344 = vmatpush1.msra.mxu0 0.0
        %1345 = vmatprep.subr.mxu0 0.0
        %1346 = vmatpush1.msra.mxu0 0.0
        %1347 = vmatprep.subr.mxu0 0.0
        %1348 = vmatpush1.msra.mxu0 0.0
        %1349 = vmatprep.subr.mxu0 0.0
        %1350 = vmatpush1.msra.mxu0 0.0
        %1351 = vmatprep.subr.mxu0 0.0
        %1352 = vmatpush1.msra.mxu0 0.0
        %1353 = vmatprep.subr.mxu0 0.0
        %1354 = vmatpush1.msra.mxu0 0.0
        %1355 = vmatprep.subr.mxu0 0.0
        %1356 = vmatpush1.msra.mxu0 0.0
        %1357 = vmatprep.subr.mxu0 0.0
        %1358 = vmatpush1.msra.mxu0 0.0
        %1359 = vmatprep.mubr.f32.mxu0 0.0
        %v1360 = vand.u32 %v373, 4294901760
        %1361 = vmatmul.mubr.f32.gmra.mrb[0].mxu0 %v1360
        %v1362 = vpop.f32.mrb[0].mxu0
        %v1363 = vadd.f32 %v1217, %v1362
        %v1364 = vpop.f32.mrb[0].mxu0
        %1365 = vmatprep.mubr.f32.mxu0 0.0
        %v1366 = vand.u32 %v376, 4294901760
        %1367 = vmatmul.mubr.f32.gmra.mrb[0].mxu0 %v1366
        %v1368 = vpop.f32.mrb[0].mxu0
        %v1369 = vadd.f32 %v1227, %v1368
        %v1370 = vpop.f32.mrb[0].mxu0
        %1371 = vmatprep.mubr.f32.mxu0 0.0
        %v1372 = vand.u32 %v379, 4294901760
        %1373 = vmatmul.mubr.f32.gmra.mrb[0].mxu0 %v1372
        %v1374 = vpop.f32.mrb[0].mxu0
        %v1375 = vadd.f32 %v1237, %v1374
        %v1376 = vpop.f32.mrb[0].mxu0
        %1377 = vmatprep.mubr.f32.mxu0 0.0
        %v1378 = vand.u32 %v382, 4294901760
        %1379 = vmatmul.mubr.f32.gmra.mrb[0].mxu0 %v1378
        %v1380 = vpop.f32.mrb[0].mxu0
        %v1381 = vadd.f32 %v1247, %v1380
        %v1382 = vpop.f32.mrb[0].mxu0
        %1383 = vmatprep.mubr.f32.mxu0 0.0
        %v1384 = vand.u32 %v385, 4294901760
        %1385 = vmatmul.mubr.f32.gmra.mrb[0].mxu0 %v1384
        %v1386 = vpop.f32.mrb[0].mxu0
        %v1387 = vadd.f32 %v1257, %v1386
        %v1388 = vpop.f32.mrb[0].mxu0
        %1389 = vmatprep.mubr.f32.mxu0 0.0
        %v1390 = vand.u32 %v388, 4294901760
        %1391 = vmatmul.mubr.f32.gmra.mrb[0].mxu0 %v1390
        %v1392 = vpop.f32.mrb[0].mxu0
        %v1393 = vadd.f32 %v1267, %v1392
        %v1394 = vpop.f32.mrb[0].mxu0
        %1395 = vmatprep.mubr.f32.mxu0 0.0
        %v1396 = vand.u32 %v391, 4294901760
        %1397 = vmatmul.mubr.f32.gmra.mrb[0].mxu0 %v1396
        %v1398 = vpop.f32.mrb[0].mxu0
        %v1399 = vadd.f32 %v1277, %v1398
        %v1400 = vpop.f32.mrb[0].mxu0
        %1401 = vmatprep.mubr.f32.mxu0 0.0
        %v1402 = vand.u32 %v394, 4294901760
        %1403 = vmatmul.mubr.f32.gmra.mrb[0].mxu0 %v1402
        %v1404 = vpop.f32.mrb[0].mxu0
        %v1405 = vadd.f32 %v1287, %v1404
        %v1406 = vpop.f32.mrb[0].mxu0
        %1407 = vdwg.mxu0
        %1408 = vmatprep.subr.mxu0 0.0
        %v1409 = vand.u32 %v1143, 4294901760
        %v1410 = vsub.f32 %v1143, %v1409
        %1411 = vmatpush1.msra.mxu0 %v1410
        %1412 = vmatprep.subr.mxu0 0.0
        %1413 = vmatpush1.msra.mxu0 0.0
        %1414 = vmatprep.subr.mxu0 0.0
        %1415 = vmatpush1.msra.mxu0 0.0
        %1416 = vmatprep.subr.mxu0 0.0
        %1417 = vmatpush1.msra.mxu0 0.0
        %1418 = vmatprep.subr.mxu0 0.0
        %1419 = vmatpush1.msra.mxu0 0.0
        %1420 = vmatprep.subr.mxu0 0.0
        %1421 = vmatpush1.msra.mxu0 0.0
        %1422 = vmatprep.subr.mxu0 0.0
        %1423 = vmatpush1.msra.mxu0 0.0
        %1424 = vmatprep.subr.mxu0 0.0
        %1425 = vmatpush1.msra.mxu0 0.0
        %1426 = vmatprep.subr.mxu0 0.0
        %1427 = vmatpush1.msra.mxu0 0.0
        %1428 = vmatprep.subr.mxu0 0.0
        %1429 = vmatpush1.msra.mxu0 0.0
        %1430 = vmatprep.subr.mxu0 0.0
        %1431 = vmatpush1.msra.mxu0 0.0
        %1432 = vmatprep.subr.mxu0 0.0
        %1433 = vmatpush1.msra.mxu0 0.0
        %1434 = vmatprep.subr.mxu0 0.0
        %1435 = vmatpush1.msra.mxu0 0.0
        %1436 = vmatprep.subr.mxu0 0.0
        %1437 = vmatpush1.msra.mxu0 0.0
        %1438 = vmatprep.subr.mxu0 0.0
        %1439 = vmatpush1.msra.mxu0 0.0
        %1440 = vmatprep.subr.mxu0 0.0
        %1441 = vmatpush1.msra.mxu0 0.0
        %1442 = vmatprep.subr.mxu0 0.0
        %1443 = vmatpush1.msra.mxu0 0.0
        %1444 = vmatprep.subr.mxu0 0.0
        %1445 = vmatpush1.msra.mxu0 0.0
        %1446 = vmatprep.subr.mxu0 0.0
        %1447 = vmatpush1.msra.mxu0 0.0
        %1448 = vmatprep.subr.mxu0 0.0
        %1449 = vmatpush1.msra.mxu0 0.0
        %1450 = vmatprep.subr.mxu0 0.0
        %1451 = vmatpush1.msra.mxu0 0.0
        %1452 = vmatprep.subr.mxu0 0.0
        %1453 = vmatpush1.msra.mxu0 0.0
        %1454 = vmatprep.subr.mxu0 0.0
        %1455 = vmatpush1.msra.mxu0 0.0
        %1456 = vmatprep.subr.mxu0 0.0
        %1457 = vmatpush1.msra.mxu0 0.0
        %1458 = vmatprep.subr.mxu0 0.0
        %1459 = vmatpush1.msra.mxu0 0.0
        %1460 = vmatprep.subr.mxu0 0.0
        %1461 = vmatpush1.msra.mxu0 0.0
        %1462 = vmatprep.subr.mxu0 0.0
        %1463 = vmatpush1.msra.mxu0 0.0
        %1464 = vmatprep.subr.mxu0 0.0
        %1465 = vmatpush1.msra.mxu0 0.0
        %1466 = vmatprep.subr.mxu0 0.0
        %1467 = vmatpush1.msra.mxu0 0.0
        %1468 = vmatprep.subr.mxu0 0.0
        %1469 = vmatpush1.msra.mxu0 0.0
        %1470 = vmatprep.subr.mxu0 0.0
        %1471 = vmatpush1.msra.mxu0 0.0
        %1472 = vmatprep.subr.mxu0 0.0
        %1473 = vmatpush1.msra.mxu0 0.0
        %1474 = vmatprep.mubr.f32.mxu0 0.0
        %v1475 = vand.u32 %v373, 4294901760
        %v1476 = vsub.f32 %v373, %v1475
        %1477 = vmatmul.mubr.f32.gmra.mrb[0].mxu0 %v1476
        %v1478 = vpop.f32.mrb[0].mxu0
        %v1479 = vadd.f32 %v1363, %v1478
        %v1480 = vpop.f32.mrb[0].mxu0
        %1481 = vmatprep.mubr.f32.mxu0 0.0
        %v1482 = vand.u32 %v376, 4294901760
        %v1483 = vsub.f32 %v376, %v1482
        %1484 = vmatmul.mubr.f32.gmra.mrb[0].mxu0 %v1483
        %v1485 = vpop.f32.mrb[0].mxu0
        %v1486 = vadd.f32 %v1369, %v1485
        %v1487 = vpop.f32.mrb[0].mxu0
        %1488 = vmatprep.mubr.f32.mxu0 0.0
        %v1489 = vand.u32 %v379, 4294901760
        %v1490 = vsub.f32 %v379, %v1489
        %1491 = vmatmul.mubr.f32.gmra.mrb[0].mxu0 %v1490
        %v1492 = vpop.f32.mrb[0].mxu0
        %v1493 = vadd.f32 %v1375, %v1492
        %v1494 = vpop.f32.mrb[0].mxu0
        %1495 = vmatprep.mubr.f32.mxu0 0.0
        %v1496 = vand.u32 %v382, 4294901760
        %v1497 = vsub.f32 %v382, %v1496
        %1498 = vmatmul.mubr.f32.gmra.mrb[0].mxu0 %v1497
        %v1499 = vpop.f32.mrb[0].mxu0
        %v1500 = vadd.f32 %v1381, %v1499
        %v1501 = vpop.f32.mrb[0].mxu0
        %1502 = vmatprep.mubr.f32.mxu0 0.0
        %v1503 = vand.u32 %v385, 4294901760
        %v1504 = vsub.f32 %v385, %v1503
        %1505 = vmatmul.mubr.f32.gmra.mrb[0].mxu0 %v1504
        %v1506 = vpop.f32.mrb[0].mxu0
        %v1507 = vadd.f32 %v1387, %v1506
        %v1508 = vpop.f32.mrb[0].mxu0
        %1509 = vmatprep.mubr.f32.mxu0 0.0
        %v1510 = vand.u32 %v388, 4294901760
        %v1511 = vsub.f32 %v388, %v1510
        %1512 = vmatmul.mubr.f32.gmra.mrb[0].mxu0 %v1511
        %v1513 = vpop.f32.mrb[0].mxu0
        %v1514 = vadd.f32 %v1393, %v1513
        %v1515 = vpop.f32.mrb[0].mxu0
        %1516 = vmatprep.mubr.f32.mxu0 0.0
        %v1517 = vand.u32 %v391, 4294901760
        %v1518 = vsub.f32 %v391, %v1517
        %1519 = vmatmul.mubr.f32.gmra.mrb[0].mxu0 %v1518
        %v1520 = vpop.f32.mrb[0].mxu0
        %v1521 = vadd.f32 %v1399, %v1520
        %v1522 = vpop.f32.mrb[0].mxu0
        %1523 = vmatprep.mubr.f32.mxu0 0.0
        %v1524 = vand.u32 %v394, 4294901760
        %v1525 = vsub.f32 %v394, %v1524
        %1526 = vmatmul.mubr.f32.gmra.mrb[0].mxu0 %v1525
        %v1527 = vpop.f32.mrb[0].mxu0
        %v1528 = vadd.f32 %v1405, %v1527
        %v1529 = vpop.f32.mrb[0].mxu0
        %1530 = vdwg.mxu0
        %1531 = vmatprep.subr.mxu0 0.0
        %v1532 = vand.u32 %v1143, 4294901760
        %1533 = vmatpush1.msra.mxu0 %v1532
        %1534 = vmatprep.subr.mxu0 0.0
        %1535 = vmatpush1.msra.mxu0 0.0
        %1536 = vmatprep.subr.mxu0 0.0
        %1537 = vmatpush1.msra.mxu0 0.0
        %1538 = vmatprep.subr.mxu0 0.0
        %1539 = vmatpush1.msra.mxu0 0.0
        %1540 = vmatprep.subr.mxu0 0.0
        %1541 = vmatpush1.msra.mxu0 0.0
        %1542 = vmatprep.subr.mxu0 0.0
        %1543 = vmatpush1.msra.mxu0 0.0
        %1544 = vmatprep.subr.mxu0 0.0
        %1545 = vmatpush1.msra.mxu0 0.0
        %1546 = vmatprep.subr.mxu0 0.0
        %1547 = vmatpush1.msra.mxu0 0.0
        %1548 = vmatprep.subr.mxu0 0.0
        %1549 = vmatpush1.msra.mxu0 0.0
        %1550 = vmatprep.subr.mxu0 0.0
        %1551 = vmatpush1.msra.mxu0 0.0
        %1552 = vmatprep.subr.mxu0 0.0
        %1553 = vmatpush1.msra.mxu0 0.0
        %1554 = vmatprep.subr.mxu0 0.0
        %1555 = vmatpush1.msra.mxu0 0.0
        %1556 = vmatprep.subr.mxu0 0.0
        %1557 = vmatpush1.msra.mxu0 0.0
        %1558 = vmatprep.subr.mxu0 0.0
        %1559 = vmatpush1.msra.mxu0 0.0
        %1560 = vmatprep.subr.mxu0 0.0
        %1561 = vmatpush1.msra.mxu0 0.0
        %1562 = vmatprep.subr.mxu0 0.0
        %1563 = vmatpush1.msra.mxu0 0.0
        %1564 = vmatprep.subr.mxu0 0.0
        %1565 = vmatpush1.msra.mxu0 0.0
        %1566 = vmatprep.subr.mxu0 0.0
        %1567 = vmatpush1.msra.mxu0 0.0
        %1568 = vmatprep.subr.mxu0 0.0
        %1569 = vmatpush1.msra.mxu0 0.0
        %1570 = vmatprep.subr.mxu0 0.0
        %1571 = vmatpush1.msra.mxu0 0.0
        %1572 = vmatprep.subr.mxu0 0.0
        %1573 = vmatpush1.msra.mxu0 0.0
        %1574 = vmatprep.subr.mxu0 0.0
        %1575 = vmatpush1.msra.mxu0 0.0
        %1576 = vmatprep.subr.mxu0 0.0
        %1577 = vmatpush1.msra.mxu0 0.0
        %1578 = vmatprep.subr.mxu0 0.0
        %1579 = vmatpush1.msra.mxu0 0.0
        %1580 = vmatprep.subr.mxu0 0.0
        %1581 = vmatpush1.msra.mxu0 0.0
        %1582 = vmatprep.subr.mxu0 0.0
        %1583 = vmatpush1.msra.mxu0 0.0
        %1584 = vmatprep.subr.mxu0 0.0
        %1585 = vmatpush1.msra.mxu0 0.0
        %1586 = vmatprep.subr.mxu0 0.0
        %1587 = vmatpush1.msra.mxu0 0.0
        %1588 = vmatprep.subr.mxu0 0.0
        %1589 = vmatpush1.msra.mxu0 0.0
        %1590 = vmatprep.subr.mxu0 0.0
        %1591 = vmatpush1.msra.mxu0 0.0
        %1592 = vmatprep.subr.mxu0 0.0
        %1593 = vmatpush1.msra.mxu0 0.0
        %1594 = vmatprep.subr.mxu0 0.0
        %1595 = vmatpush1.msra.mxu0 0.0
        %1596 = vmatprep.mubr.f32.mxu0 0.0
        %v1597 = vand.u32 %v373, 4294901760
        %v1598 = vsub.f32 %v373, %v1597
        %v1599 = vand.u32 %v1598, 4294901760
        %1600 = vmatmul.mubr.f32.gmra.mrb[0].mxu0 %v1599
        %v1601 = vpop.f32.mrb[0].mxu0
        %v1602 = vadd.f32 %v1479, %v1601
        %v1603 = vpop.f32.mrb[0].mxu0
        %1604 = vmatprep.mubr.f32.mxu0 0.0
        %v1605 = vand.u32 %v376, 4294901760
        %v1606 = vsub.f32 %v376, %v1605
        %v1607 = vand.u32 %v1606, 4294901760
        %1608 = vmatmul.mubr.f32.gmra.mrb[0].mxu0 %v1607
        %v1609 = vpop.f32.mrb[0].mxu0
        %v1610 = vadd.f32 %v1486, %v1609
        %v1611 = vpop.f32.mrb[0].mxu0
        %1612 = vmatprep.mubr.f32.mxu0 0.0
        %v1613 = vand.u32 %v379, 4294901760
        %v1614 = vsub.f32 %v379, %v1613
        %v1615 = vand.u32 %v1614, 4294901760
        %1616 = vmatmul.mubr.f32.gmra.mrb[0].mxu0 %v1615
        %v1617 = vpop.f32.mrb[0].mxu0
        %v1618 = vadd.f32 %v1493, %v1617
        %v1619 = vpop.f32.mrb[0].mxu0
        %1620 = vmatprep.mubr.f32.mxu0 0.0
        %v1621 = vand.u32 %v382, 4294901760
        %v1622 = vsub.f32 %v382, %v1621
        %v1623 = vand.u32 %v1622, 4294901760
        %1624 = vmatmul.mubr.f32.gmra.mrb[0].mxu0 %v1623
        %v1625 = vpop.f32.mrb[0].mxu0
        %v1626 = vadd.f32 %v1500, %v1625
        %v1627 = vpop.f32.mrb[0].mxu0
        %1628 = vmatprep.mubr.f32.mxu0 0.0
        %v1629 = vand.u32 %v385, 4294901760
        %v1630 = vsub.f32 %v385, %v1629
        %v1631 = vand.u32 %v1630, 4294901760
        %1632 = vmatmul.mubr.f32.gmra.mrb[0].mxu0 %v1631
        %v1633 = vpop.f32.mrb[0].mxu0
        %v1634 = vadd.f32 %v1507, %v1633
        %v1635 = vpop.f32.mrb[0].mxu0
        %1636 = vmatprep.mubr.f32.mxu0 0.0
        %v1637 = vand.u32 %v388, 4294901760
        %v1638 = vsub.f32 %v388, %v1637
        %v1639 = vand.u32 %v1638, 4294901760
        %1640 = vmatmul.mubr.f32.gmra.mrb[0].mxu0 %v1639
        %v1641 = vpop.f32.mrb[0].mxu0
        %v1642 = vadd.f32 %v1514, %v1641
        %v1643 = vpop.f32.mrb[0].mxu0
        %1644 = vmatprep.mubr.f32.mxu0 0.0
        %v1645 = vand.u32 %v391, 4294901760
        %v1646 = vsub.f32 %v391, %v1645
        %v1647 = vand.u32 %v1646, 4294901760
        %1648 = vmatmul.mubr.f32.gmra.mrb[0].mxu0 %v1647
        %v1649 = vpop.f32.mrb[0].mxu0
        %v1650 = vadd.f32 %v1521, %v1649
        %v1651 = vpop.f32.mrb[0].mxu0
        %1652 = vmatprep.mubr.f32.mxu0 0.0
        %v1653 = vand.u32 %v394, 4294901760
        %v1654 = vsub.f32 %v394, %v1653
        %v1655 = vand.u32 %v1654, 4294901760
        %1656 = vmatmul.mubr.f32.gmra.mrb[0].mxu0 %v1655
        %v1657 = vpop.f32.mrb[0].mxu0
        %v1658 = vadd.f32 %v1528, %v1657
        %v1659 = vpop.f32.mrb[0].mxu0
        %1660 = vdwg.mxu0
        %1661 = vmatprep.subr.mxu0 0.0
        %v1662 = vand.u32 %v1143, 4294901760
        %v1663 = vsub.f32 %v1143, %v1662
        %v1664 = vand.u32 %v1663, 4294901760
        %1665 = vmatpush1.msra.mxu0 %v1664
        %1666 = vmatprep.subr.mxu0 0.0
        %1667 = vmatpush1.msra.mxu0 0.0
        %1668 = vmatprep.subr.mxu0 0.0
        %1669 = vmatpush1.msra.mxu0 0.0
        %1670 = vmatprep.subr.mxu0 0.0
        %1671 = vmatpush1.msra.mxu0 0.0
        %1672 = vmatprep.subr.mxu0 0.0
        %1673 = vmatpush1.msra.mxu0 0.0
        %1674 = vmatprep.subr.mxu0 0.0
        %1675 = vmatpush1.msra.mxu0 0.0
        %1676 = vmatprep.subr.mxu0 0.0
        %1677 = vmatpush1.msra.mxu0 0.0
        %1678 = vmatprep.subr.mxu0 0.0
        %1679 = vmatpush1.msra.mxu0 0.0
        %1680 = vmatprep.subr.mxu0 0.0
        %1681 = vmatpush1.msra.mxu0 0.0
        %1682 = vmatprep.subr.mxu0 0.0
        %1683 = vmatpush1.msra.mxu0 0.0
        %1684 = vmatprep.subr.mxu0 0.0
        %1685 = vmatpush1.msra.mxu0 0.0
        %1686 = vmatprep.subr.mxu0 0.0
        %1687 = vmatpush1.msra.mxu0 0.0
        %1688 = vmatprep.subr.mxu0 0.0
        %1689 = vmatpush1.msra.mxu0 0.0
        %1690 = vmatprep.subr.mxu0 0.0
        %1691 = vmatpush1.msra.mxu0 0.0
        %1692 = vmatprep.subr.mxu0 0.0
        %1693 = vmatpush1.msra.mxu0 0.0
        %1694 = vmatprep.subr.mxu0 0.0
        %1695 = vmatpush1.msra.mxu0 0.0
        %1696 = vmatprep.subr.mxu0 0.0
        %1697 = vmatpush1.msra.mxu0 0.0
        %1698 = vmatprep.subr.mxu0 0.0
        %1699 = vmatpush1.msra.mxu0 0.0
        %1700 = vmatprep.subr.mxu0 0.0
        %1701 = vmatpush1.msra.mxu0 0.0
        %1702 = vmatprep.subr.mxu0 0.0
        %1703 = vmatpush1.msra.mxu0 0.0
        %1704 = vmatprep.subr.mxu0 0.0
        %1705 = vmatpush1.msra.mxu0 0.0
        %1706 = vmatprep.subr.mxu0 0.0
        %1707 = vmatpush1.msra.mxu0 0.0
        %1708 = vmatprep.subr.mxu0 0.0
        %1709 = vmatpush1.msra.mxu0 0.0
        %1710 = vmatprep.subr.mxu0 0.0
        %1711 = vmatpush1.msra.mxu0 0.0
        %1712 = vmatprep.subr.mxu0 0.0
        %1713 = vmatpush1.msra.mxu0 0.0
        %1714 = vmatprep.subr.mxu0 0.0
        %1715 = vmatpush1.msra.mxu0 0.0
        %1716 = vmatprep.subr.mxu0 0.0
        %1717 = vmatpush1.msra.mxu0 0.0
        %1718 = vmatprep.subr.mxu0 0.0
        %1719 = vmatpush1.msra.mxu0 0.0
        %1720 = vmatprep.subr.mxu0 0.0
        %1721 = vmatpush1.msra.mxu0 0.0
        %1722 = vmatprep.subr.mxu0 0.0
        %1723 = vmatpush1.msra.mxu0 0.0
        %1724 = vmatprep.subr.mxu0 0.0
        %1725 = vmatpush1.msra.mxu0 0.0
        %1726 = vmatprep.subr.mxu0 0.0
        %1727 = vmatpush1.msra.mxu0 0.0
        %1728 = vmatprep.mubr.f32.mxu0 0.0
        %v1729 = vand.u32 %v373, 4294901760
        %1730 = vmatmul.mubr.f32.gmra.mrb[0].mxu0 %v1729
        %v1731 = vpop.f32.mrb[0].mxu0
        %v1732 = vadd.f32 %v1602, %v1731
        %v1733 = vpop.f32.mrb[0].mxu0
        %1734 = vmatprep.mubr.f32.mxu0 0.0
        %v1735 = vand.u32 %v376, 4294901760
        %1736 = vmatmul.mubr.f32.gmra.mrb[0].mxu0 %v1735
        %v1737 = vpop.f32.mrb[0].mxu0
        %v1738 = vadd.f32 %v1610, %v1737
        %v1739 = vpop.f32.mrb[0].mxu0
        %1740 = vmatprep.mubr.f32.mxu0 0.0
        %v1741 = vand.u32 %v379, 4294901760
        %1742 = vmatmul.mubr.f32.gmra.mrb[0].mxu0 %v1741
        %v1743 = vpop.f32.mrb[0].mxu0
        %v1744 = vadd.f32 %v1618, %v1743
        %v1745 = vpop.f32.mrb[0].mxu0
        %1746 = vmatprep.mubr.f32.mxu0 0.0
        %v1747 = vand.u32 %v382, 4294901760
        %1748 = vmatmul.mubr.f32.gmra.mrb[0].mxu0 %v1747
        %v1749 = vpop.f32.mrb[0].mxu0
        %v1750 = vadd.f32 %v1626, %v1749
        %v1751 = vpop.f32.mrb[0].mxu0
        %1752 = vmatprep.mubr.f32.mxu0 0.0
        %v1753 = vand.u32 %v385, 4294901760
        %1754 = vmatmul.mubr.f32.gmra.mrb[0].mxu0 %v1753
        %v1755 = vpop.f32.mrb[0].mxu0
        %v1756 = vadd.f32 %v1634, %v1755
        %v1757 = vpop.f32.mrb[0].mxu0
        %1758 = vmatprep.mubr.f32.mxu0 0.0
        %v1759 = vand.u32 %v388, 4294901760
        %1760 = vmatmul.mubr.f32.gmra.mrb[0].mxu0 %v1759
        %v1761 = vpop.f32.mrb[0].mxu0
        %v1762 = vadd.f32 %v1642, %v1761
        %v1763 = vpop.f32.mrb[0].mxu0
        %1764 = vmatprep.mubr.f32.mxu0 0.0
        %v1765 = vand.u32 %v391, 4294901760
        %1766 = vmatmul.mubr.f32.gmra.mrb[0].mxu0 %v1765
        %v1767 = vpop.f32.mrb[0].mxu0
        %v1768 = vadd.f32 %v1650, %v1767
        %v1769 = vpop.f32.mrb[0].mxu0
        %1770 = vmatprep.mubr.f32.mxu0 0.0
        %v1771 = vand.u32 %v394, 4294901760
        %1772 = vmatmul.mubr.f32.gmra.mrb[0].mxu0 %v1771
        %v1773 = vpop.f32.mrb[0].mxu0
        %v1774 = vadd.f32 %v1658, %v1773
        %v1775 = vpop.f32.mrb[0].mxu0
        %1776 = vdwg.mxu0
        %1777 = vmatprep.subr.mxu0 0.0
        %v1778 = vand.u32 %v1143, 4294901760
        %1779 = vmatpush1.msra.mxu0 %v1778
        %1780 = vmatprep.subr.mxu0 0.0
        %1781 = vmatpush1.msra.mxu0 0.0
        %1782 = vmatprep.subr.mxu0 0.0
        %1783 = vmatpush1.msra.mxu0 0.0
        %1784 = vmatprep.subr.mxu0 0.0
        %1785 = vmatpush1.msra.mxu0 0.0
        %1786 = vmatprep.subr.mxu0 0.0
        %1787 = vmatpush1.msra.mxu0 0.0
        %1788 = vmatprep.subr.mxu0 0.0
        %1789 = vmatpush1.msra.mxu0 0.0
        %1790 = vmatprep.subr.mxu0 0.0
        %1791 = vmatpush1.msra.mxu0 0.0
        %1792 = vmatprep.subr.mxu0 0.0
        %1793 = vmatpush1.msra.mxu0 0.0
        %1794 = vmatprep.subr.mxu0 0.0
        %1795 = vmatpush1.msra.mxu0 0.0
        %1796 = vmatprep.subr.mxu0 0.0
        %1797 = vmatpush1.msra.mxu0 0.0
        %1798 = vmatprep.subr.mxu0 0.0
        %1799 = vmatpush1.msra.mxu0 0.0
        %1800 = vmatprep.subr.mxu0 0.0
        %1801 = vmatpush1.msra.mxu0 0.0
        %1802 = vmatprep.subr.mxu0 0.0
        %1803 = vmatpush1.msra.mxu0 0.0
        %1804 = vmatprep.subr.mxu0 0.0
        %1805 = vmatpush1.msra.mxu0 0.0
        %1806 = vmatprep.subr.mxu0 0.0
        %1807 = vmatpush1.msra.mxu0 0.0
        %1808 = vmatprep.subr.mxu0 0.0
        %1809 = vmatpush1.msra.mxu0 0.0
        %1810 = vmatprep.subr.mxu0 0.0
        %1811 = vmatpush1.msra.mxu0 0.0
        %1812 = vmatprep.subr.mxu0 0.0
        %1813 = vmatpush1.msra.mxu0 0.0
        %1814 = vmatprep.subr.mxu0 0.0
        %1815 = vmatpush1.msra.mxu0 0.0
        %1816 = vmatprep.subr.mxu0 0.0
        %1817 = vmatpush1.msra.mxu0 0.0
        %1818 = vmatprep.subr.mxu0 0.0
        %1819 = vmatpush1.msra.mxu0 0.0
        %1820 = vmatprep.subr.mxu0 0.0
        %1821 = vmatpush1.msra.mxu0 0.0
        %1822 = vmatprep.subr.mxu0 0.0
        %1823 = vmatpush1.msra.mxu0 0.0
        %1824 = vmatprep.subr.mxu0 0.0
        %1825 = vmatpush1.msra.mxu0 0.0
        %1826 = vmatprep.subr.mxu0 0.0
        %1827 = vmatpush1.msra.mxu0 0.0
        %1828 = vmatprep.subr.mxu0 0.0
        %1829 = vmatpush1.msra.mxu0 0.0
        %1830 = vmatprep.subr.mxu0 0.0
        %1831 = vmatpush1.msra.mxu0 0.0
        %1832 = vmatprep.subr.mxu0 0.0
        %1833 = vmatpush1.msra.mxu0 0.0
        %1834 = vmatprep.subr.mxu0 0.0
        %1835 = vmatpush1.msra.mxu0 0.0
        %1836 = vmatprep.subr.mxu0 0.0
        %1837 = vmatpush1.msra.mxu0 0.0
        %1838 = vmatprep.subr.mxu0 0.0
        %1839 = vmatpush1.msra.mxu0 0.0
        %1840 = vmatprep.subr.mxu0 0.0
        %1841 = vmatpush1.msra.mxu0 0.0
        %1842 = vmatprep.mubr.f32.mxu0 0.0
        %v1843 = vand.u32 %v373, 4294901760
        %1844 = vmatmul.mubr.f32.gmra.mrb[0].mxu0 %v1843
        %v1845 = vpop.f32.mrb[0].mxu0
        %v1846 = vadd.f32 %v1732, %v1845
        %v1847 = vpop.f32.mrb[0].mxu0
        %1848 = vmatprep.mubr.f32.mxu0 0.0
        %v1849 = vand.u32 %v376, 4294901760
        %1850 = vmatmul.mubr.f32.gmra.mrb[0].mxu0 %v1849
        %v1851 = vpop.f32.mrb[0].mxu0
        %v1852 = vadd.f32 %v1738, %v1851
        %v1853 = vpop.f32.mrb[0].mxu0
        %1854 = vmatprep.mubr.f32.mxu0 0.0
        %v1855 = vand.u32 %v379, 4294901760
        %1856 = vmatmul.mubr.f32.gmra.mrb[0].mxu0 %v1855
        %v1857 = vpop.f32.mrb[0].mxu0
        %v1858 = vadd.f32 %v1744, %v1857
        %v1859 = vpop.f32.mrb[0].mxu0
        %1860 = vmatprep.mubr.f32.mxu0 0.0
        %v1861 = vand.u32 %v382, 4294901760
        %1862 = vmatmul.mubr.f32.gmra.mrb[0].mxu0 %v1861
        %v1863 = vpop.f32.mrb[0].mxu0
        %v1864 = vadd.f32 %v1750, %v1863
        %v1865 = vpop.f32.mrb[0].mxu0
        %1866 = vmatprep.mubr.f32.mxu0 0.0
        %v1867 = vand.u32 %v385, 4294901760
        %1868 = vmatmul.mubr.f32.gmra.mrb[0].mxu0 %v1867
        %v1869 = vpop.f32.mrb[0].mxu0
        %v1870 = vadd.f32 %v1756, %v1869
        %v1871 = vpop.f32.mrb[0].mxu0
        %1872 = vmatprep.mubr.f32.mxu0 0.0
        %v1873 = vand.u32 %v388, 4294901760
        %1874 = vmatmul.mubr.f32.gmra.mrb[0].mxu0 %v1873
        %v1875 = vpop.f32.mrb[0].mxu0
        %v1876 = vadd.f32 %v1762, %v1875
        %v1877 = vpop.f32.mrb[0].mxu0
        %1878 = vmatprep.mubr.f32.mxu0 0.0
        %v1879 = vand.u32 %v391, 4294901760
        %1880 = vmatmul.mubr.f32.gmra.mrb[0].mxu0 %v1879
        %v1881 = vpop.f32.mrb[0].mxu0
        %v1882 = vadd.f32 %v1768, %v1881
        %v1883 = vpop.f32.mrb[0].mxu0
        %1884 = vmatprep.mubr.f32.mxu0 0.0
        %v1885 = vand.u32 %v394, 4294901760
        %1886 = vmatmul.mubr.f32.gmra.mrb[0].mxu0 %v1885
        %v1887 = vpop.f32.mrb[0].mxu0
        %v1888 = vadd.f32 %v1774, %v1887
        %v1889 = vpop.f32.mrb[0].mxu0
        %1890 = vdwg.mxu0
        %v1891 = vmul.f32 %v1098, %v1098
        %v1892 = vmul.f32 %v1104, %v1104
        %v1893 = vmul.f32 %v1110, %v1110
        %v1894 = vmul.f32 %v1116, %v1116
        %v1895 = vmul.f32 %v1122, %v1122
        %v1896 = vmul.f32 %v1128, %v1128
        %v1897 = vmul.f32 %v1134, %v1134
        %v1898 = vmul.f32 %v1140, %v1140
        %v1899 = vmul.f32 %v1846, %v1846
        %v1900 = vmul.f32 %v1852, %v1852
        %v1901 = vmul.f32 %v1858, %v1858
        %v1902 = vmul.f32 %v1864, %v1864
        %v1903 = vmul.f32 %v1870, %v1870
        %v1904 = vmul.f32 %v1876, %v1876
        %v1905 = vmul.f32 %v1882, %v1882
        %v1906 = vmul.f32 %v1888, %v1888
        %v1907 = vadd.f32 %v1891, %v1899
        %v1908 = vadd.f32 %v1892, %v1900
        %v1909 = vadd.f32 %v1893, %v1901
        %v1910 = vadd.f32 %v1894, %v1902
        %v1911 = vadd.f32 %v1895, %v1903
        %v1912 = vadd.f32 %v1896, %v1904
        %v1913 = vadd.f32 %v1897, %v1905
        %v1914 = vadd.f32 %v1898, %v1906
        %v1915 = vrsqrt.pop %v1907
        %v1916 = vmul.f32 %v1907, %v1915
        %vm1917 = vcmp.eq.f32.partialorder %v1907, inf
        %v1918 = vsel %vm1917, %v1907, %v1916
        %vm1919 = vcmp.eq.f32.partialorder %v1907, 0.0
        %v1920 = vand.u32 %v1907, 2147483648
        %v1921 = vsel %vm1919, %v1920, %v1918
        %v1922 = vrsqrt.pop %v1908
        %v1923 = vmul.f32 %v1908, %v1922
        %vm1924 = vcmp.eq.f32.partialorder %v1908, inf
        %v1925 = vsel %vm1924, %v1908, %v1923
        %vm1926 = vcmp.eq.f32.partialorder %v1908, 0.0
        %v1927 = vand.u32 %v1908, 2147483648
        %v1928 = vsel %vm1926, %v1927, %v1925
        %v1929 = vrsqrt.pop %v1909
        %v1930 = vmul.f32 %v1909, %v1929
        %vm1931 = vcmp.eq.f32.partialorder %v1909, inf
        %v1932 = vsel %vm1931, %v1909, %v1930
        %vm1933 = vcmp.eq.f32.partialorder %v1909, 0.0
        %v1934 = vand.u32 %v1909, 2147483648
        %v1935 = vsel %vm1933, %v1934, %v1932
        %v1936 = vrsqrt.pop %v1910
        %v1937 = vmul.f32 %v1910, %v1936
        %vm1938 = vcmp.eq.f32.partialorder %v1910, inf
        %v1939 = vsel %vm1938, %v1910, %v1937
        %vm1940 = vcmp.eq.f32.partialorder %v1910, 0.0
        %v1941 = vand.u32 %v1910, 2147483648
        %v1942 = vsel %vm1940, %v1941, %v1939
        %v1943 = vrsqrt.pop %v1911
        %v1944 = vmul.f32 %v1911, %v1943
        %vm1945 = vcmp.eq.f32.partialorder %v1911, inf
        %v1946 = vsel %vm1945, %v1911, %v1944
        %vm1947 = vcmp.eq.f32.partialorder %v1911, 0.0
        %v1948 = vand.u32 %v1911, 2147483648
        %v1949 = vsel %vm1947, %v1948, %v1946
        %v1950 = vrsqrt.pop %v1912
        %v1951 = vmul.f32 %v1912, %v1950
        %vm1952 = vcmp.eq.f32.partialorder %v1912, inf
        %v1953 = vsel %vm1952, %v1912, %v1951
        %vm1954 = vcmp.eq.f32.partialorder %v1912, 0.0
        %v1955 = vand.u32 %v1912, 2147483648
        %v1956 = vsel %vm1954, %v1955, %v1953
        %v1957 = vrsqrt.pop %v1913
        %v1958 = vmul.f32 %v1913, %v1957
        %vm1959 = vcmp.eq.f32.partialorder %v1913, inf
        %v1960 = vsel %vm1959, %v1913, %v1958
        %vm1961 = vcmp.eq.f32.partialorder %v1913, 0.0
        %v1962 = vand.u32 %v1913, 2147483648
        %v1963 = vsel %vm1961, %v1962, %v1960
        %v1964 = vrsqrt.pop %v1914
        %v1965 = vmul.f32 %v1914, %v1964
        %vm1966 = vcmp.eq.f32.partialorder %v1914, inf
        %v1967 = vsel %vm1966, %v1914, %v1965
        %vm1968 = vcmp.eq.f32.partialorder %v1914, 0.0
        %v1969 = vand.u32 %v1914, 2147483648
        %v1970 = vsel %vm1968, %v1969, %v1967
        %v1971 = vsub.f32 %v1921, %v1949
        %v1972 = vsub.f32 %v1928, %v1956
        %v1973 = vsub.f32 %v1935, %v1963
        %v1974 = vsub.f32 %v1942, %v1970
        %v1975 = vmul.f32 %v1971, %v1971
        %v1976 = vmul.f32 %v1972, %v1972
        %v1977 = vmul.f32 %v1973, %v1973
        %v1978 = vmul.f32 %v1974, %v1974
        %v1980 = vlaneseq
        %v1981 = vshrl.u32 %v1980, 7
        %v1982 = vsub.s32 0, %v1981
        %v1983 = vrot.slane %v335, %v1982
        %v1985 = vmul.f32 %v1975, %v1983
        %v1986 = vmul.f32 %v1976, %v1983
        %v1987 = vmul.f32 %v1977, %v1983
        %v1988 = vmul.f32 %v1978, %v1983
        %v1989 = vadd.f32 %v1985, %v1986
        %v1990 = vadd.f32 %v1989, %v1987
        %v1991 = vadd.f32 %v1990, %v1988
        %1992 = vadd.xlane.f32.xlu0 %v1991
        %v1993 = vpop.xlane.xlu0 %1992
        %v1994 = vrot.slane %v1993, 4
        %v1995 = vadd.f32 %v1993, %v1994
        %v1996 = vrot.slane %v1995, 2
        %v1997 = vadd.f32 %v1995, %v1996
        %v1998 = vrot.slane %v1997, 1
        %v1999 = vadd.f32 %v1997, %v1998
        %s2000 = vtos %v1999
        %v2001 = vlaneseq
        %v2002 = vand.u32 %v2001, 127
        %v2003 = vld [vmem:[#allocation4] sm:$0x1]
        %vm2004 = vcmp.eq.s32.totalorder %v2002, 0
        %v2005 = vstv %s370
        %v2006 = vsel %vm2004, %v2005, 0.0
        %vm2007 = vcmp.eq.s32.totalorder %v2002, 1
        %v2008 = vstv %s2000
        %v2009 = vsel %vm2007, %v2008, 0.0
        %v2010 = vadd.f32 %v2006, %v2009
        %v2011 = vadd.f32 %v2003, %v2010
        %2012 = vst [vmem:[#allocation4] sm:$0x1] %v2011
        // Predicated region
        $region107: #{tpu_custom_call.1} parent=31 // pred_check
          %p2013 = pneg %p231
        $region108: #{tpu_custom_call.1} parent=31 // pred_check_branch
          %2015 = sbr.rel (%p2013) target = $region110
        $region109: #{tpu_custom_call.1} parent=31 // pred_region
          %v2016 = vld [vmem:[#allocation4] sm:$0x1]
          %2017 = vst [vmem:[%s213] sm:$0x1] %v2016
        $region110: #{tpu_custom_call.1} parent=31 // pred_fallthru
          _
        %s2018 = sand.u32 %s123, 1
        %s2019 = scalar_lea.sflag [#allocation6], %s2018
        %s2020 = sand.u32 %s123, 1
        %s2021 = scalar_lea.vmem [#allocation5], %s2020
        // Predicated region
        $region111: #{tpu_custom_call.1} parent=31 // pred_check
          %p2022 = pneg %p133
        $region112: #{tpu_custom_call.1} parent=31 // pred_check_branch
          %2024 = sbr.rel (%p2022) target = $region114
        $region113: #{tpu_custom_call.1} parent=31 // pred_region
          %s2026 = ssub.s32 16, 16
          %2027 = vsyncadd %s2019, %s2026
          %s2028 = smul.addr %s23, 16
          %s2029 = scalar_lea.hbm %s5, %s2028
          %s2031 = sshll.u32 %s2021, 4
          %s2032 = int_to_ptr.vmem [resolvable:$true] %s2031
          %2034 = dma.vmem_to_hbm [thread:$0]  %s2032, 16, %s2029, %s2019
        $region114: #{tpu_custom_call.1} parent=31 // pred_fallthru
          _
      $region32: #{tpu_custom_call.1} parent=5 // pred_fallthru
        _
      %p2035 = scmp.le.s32.totalorder 2, %s14
      // Predicated region
      $region115: #{tpu_custom_call.1} parent=5 // pred_check
        %p2036 = pneg %p2035
      $region116: #{tpu_custom_call.1} parent=5 // pred_check_branch
        %2038 = sbr.rel (%p2036) target = $region118
      $region117: #{tpu_custom_call.1} parent=5 // pred_region
        %s2039 = ssub.s32 %s14, 2
        // Predicated region
        $region119: #{tpu_custom_call.1} parent=117 // pred_check
          %p2040 = pneg %p139
        $region120: #{tpu_custom_call.1} parent=117 // pred_check_branch
          %2042 = sbr.rel (%p2040) target = $region122
        $region121: #{tpu_custom_call.1} parent=117 // pred_region
          %s2043 = sand.u32 %s124, 1
          %s2044 = scalar_lea.sflag [#allocation6], %s2043
          %s2045 = sand.u32 %s124, 1
          %s2046 = scalar_lea.vmem [#allocation5], %s2045
          %2047 = dma.done %s2044, 16
        $region122: #{tpu_custom_call.1} parent=117 // pred_fallthru
          _
      $region118: #{tpu_custom_call.1} parent=5 // pred_fallthru
        _
    $region6: #{tpu_custom_call.1} parent=1 // loop_footer
      %s18 = sadd.s32 1, %s14
    $region7: #{tpu_custom_call.1} parent=1 // loop_footer_branch
      %13 = sbr.rel target = $region3
    $region8: #{tpu_custom_call.1} parent=1 // loop_exit
      _
    %2048 = vsyncpa [#allocation6], 1
    %s2049 = scalar_lea.sflag [#allocation6], 1
    %2050 = vsyncpa %s2049, 1

</llo_original>
